<compile_context>
chip_gen: v7x
topology: tpu7x:2x2x1
jax: 0.10.0
libtpu: 0.0.40
codegen_flags: <defaults>
</compile_context>

<pallas_src>
import math

import jax
import jax.numpy as jnp
from jax.experimental import pallas as pl
from jax.experimental.pallas import tpu as pltpu

# ----------------------------- configuration --------------------------------
NET_W     = 32                       # args.net_width   (W)
DEFOR_D   = 2                        # args.defor_depth (D)
FEAT_DIM  = 8                        # args.deform_feat_dim
N_OFFSETS = 4                        # args.deform_n_offsets

HEAD_OUTS = (3, FEAT_DIM, N_OFFSETS * 3, 6)     # pos, feature, offsets, scaling
OUT_REAL  = sum(HEAD_OUTS)                      # 29
OUT_PAD   = 32                                  # padded output rows
IN_ROWS   = 8 + OUT_PAD                         # 40: [x,y,z,t,dyn0,dyn1,1,0] + residual(32)

WH1_OFF   = NET_W * DEFOR_D                     # fused head layer-1 weights start row
WH2_OFF   = WH1_OFF + 4 * NET_W                 # fused head layer-2 (block-diag) start row
SLAB_ROWS = WH2_OFF + OUT_PAD                   # 224 total weight-slab rows

FLOPS_PER_POINT = 2 * (NET_W * 8 + (DEFOR_D - 1) * NET_W * NET_W
                       + 4 * NET_W * NET_W + OUT_PAD * 4 * NET_W)   # ~18944


# ------------------------------- Pallas kernel -------------------------------
def _make_deform_kernel(depth, width):
    wh1 = width * depth
    wh2 = wh1 + 4 * width

    def kernel(x_ref, w_ref, b_ref, out_ref):
        f32 = jnp.float32

        # rows 0:8 of the input slab: [ax, ay, az, t, dyn_anchor, dyn_feat, 1, 0]
        blk0 = x_ref[0:8, :]                                     # [8, T]

        # trunk (feature_out): Linear(4,W) + (D-1) x (ReLU, Linear(W,W)).
        # Layer-0 bias is folded into weight column 6 (input row 6 == 1.0);
        # cols 4,5,7 of W0 are zero so the dyn/pad rows contribute nothing.
        h = jnp.dot(w_ref[0:width, 0:8], blk0, preferred_element_type=f32)
        for i in range(1, depth):
            r = width * i
            h = (jnp.dot(w_ref[r:r + width, 0:width], jnp.maximum(h, 0.0),
                         preferred_element_type=f32)
                 + b_ref[r:r + width, :])
        hr = jnp.maximum(h, 0.0)                                 # relu(hidden), once

        # fused head layer 1: four Linear(W,W) stacked -> [4W, W]
        t = (jnp.dot(w_ref[wh1:wh2, 0:width], hr, preferred_element_type=f32)
             + b_ref[wh1:wh2, :])

        # fused head layer 2: block-diagonal [OUT_PAD, 4W]
        delta = (jnp.dot(w_ref[wh2:wh2 + OUT_PAD, :], jnp.maximum(t, 0.0),
                         preferred_element_type=f32)
                 + b_ref[wh2:wh2 + OUT_PAD, :])                  # [32, T]

        # dynamics (gvc_dynamics_type='mul', dynamics_activation='relu')
        dyn_a = jnp.maximum(blk0[4:5, :], 0.0)                   # dynamics[:, 0]
        dyn_f = jnp.maximum(blk0[5:6, :], 0.0)                   # dynamics[:, -1]

        # static_mlp=False, empty_voxel=False -> mask == 1 (multiply removed).
        # Store all rows with the feature-dynamics scale, then overwrite the
        # 3 anchor rows with the anchor-dynamics scale (small sublane store).
        res = x_ref[8:8 + OUT_PAD, :]
        out_ref[...] = res + delta * dyn_f
        out_ref[0:3, :] = x_ref[8:11, :] + delta[0:3, :] * dyn_a

    return kernel


# ------------------------------ parameter init -------------------------------
def init_params(key):
    n_lin = DEFOR_D + 2 * len(HEAD_OUTS)
    keys = iter(jax.random.split(key, 2 * n_lin))

    def lin(out_dim, in_dim):
        kw, kb = next(keys), next(keys)
        bw = math.sqrt(6.0 / (in_dim + out_dim))          # xavier_uniform, gain=1
        w = jax.random.uniform(kw, (out_dim, in_dim), jnp.float32, -bw, bw)
        bb = 1.0 / math.sqrt(in_dim)                      # PyTorch default bias init
        b = jax.random.uniform(kb, (out_dim,), jnp.float32, -bb, bb)
        return w, b

    trunk = [lin(NET_W, 4)] + [lin(NET_W, NET_W) for _ in range(DEFOR_D - 1)]
    heads = [(lin(NET_W, NET_W), lin(o, NET_W)) for o in HEAD_OUTS]
    return dict(trunk=trunk, heads=heads)


def pack_params(params):
    """Pack all Linear layers into one weight slab [224,128] and one bias slab [224,1].

    NOTE: keeping the slabs in f32.  bf16 weights/activations would halve matmul
    traffic (mostly matters on v5e) but needs a looser (~1e-2) test tolerance.
    """
    W = NET_W
    w_slab = jnp.zeros((SLAB_ROWS, 128), jnp.float32)
    b_slab = jnp.zeros((SLAB_ROWS, 1), jnp.float32)

    w0, b0 = params["trunk"][0]                           # [W,4], [W]
    w_slab = w_slab.at[0:W, 0:4].set(w0)
    w_slab = w_slab.at[0:W, 6].set(b0)                    # layer-0 bias folded (row 6 = 1.0)
    for i in range(1, DEFOR_D):
        wi, bi = params["trunk"][i]
        w_slab = w_slab.at[W * i:W * (i + 1), 0:W].set(wi)
        b_slab = b_slab.at[W * i:W * (i + 1), 0].set(bi)

    orow = 0
    for k, ((w1, b1), (w2, b2)) in enumerate(params["heads"]):
        w_slab = w_slab.at[WH1_OFF + k * W:WH1_OFF + (k + 1) * W, 0:W].set(w1)
        b_slab = b_slab.at[WH1_OFF + k * W:WH1_OFF + (k + 1) * W, 0].set(b1)
        o = HEAD_OUTS[k]
        w_slab = w_slab.at[WH2_OFF + orow:WH2_OFF + orow + o, k * W:(k + 1) * W].set(w2)
        b_slab = b_slab.at[WH2_OFF + orow:WH2_OFF + orow + o, 0].set(b2)
        orow += o
    return w_slab, b_slab


# --------------------------------- wrapper -----------------------------------
def _pick_tile_n(n, target=8192):
    """Multiple-of-128 tile; target 8192 (v5e/v6e/v7x VMEM-safe) but >= 2 tiles."""
    n128 = max(128, ((n + 127) // 128) * 128)
    if n128 <= 256:
        return n128
    half = ((n128 + 255) // 256) * 128          # ceil(n128/2) rounded up to 128
    return min(target, half)


def _build_input_slab(anchor, feat, grid_offsets, grid_scaling, dynamics, times_sel):
    n = anchor.shape[0]
    off_flat = grid_offsets.reshape(n, N_OFFSETS * 3)
    slab = jnp.concatenate([
        anchor,                                    # rows 0:3   MLP input xyz
        times_sel[:, :1],                          # row  3     MLP input t
        dynamics[:, 0:1],                          # row  4     dynamics[:, 0]
        dynamics[:, -1:],                          # row  5     dynamics[:, -1]
        jnp.ones((n, 1), jnp.float32),             # row  6     bias-fold row (== 1)
        jnp.zeros((n, 1), jnp.float32),            # row  7     pad
        anchor,                                    # rows 8:11  residual pos
        feat,                                      # rows 11:19 residual feature
        off_flat,                                  # rows 19:31 residual offsets
        grid_scaling,                              # rows 31:37 residual scaling
        jnp.zeros((n, OUT_PAD - OUT_REAL), jnp.float32),   # rows 37:40 pad
    ], axis=1).astype(jnp.float32)
    return slab.T                                  # [IN_ROWS, n]


def deform_forward_slab(w_slab, b_slab, x_slab, *, tile_n=None, input_buffers=None):
    """Channels-major entry point: x_slab [IN_ROWS, n] -> deformed slab [OUT_PAD, n].

    Consumers that already keep per-point tensors channels-major should use this
    directly and slice the [32, n] result; it avoids the transpose/concat HBM
    passes of the PyTorch-layout wrapper below.
    """
    n = x_slab.shape[1]
    if tile_n is None:
        tile_n = _pick_tile_n(n)
    n_pad = ((n + tile_n - 1) // tile_n) * tile_n
    if n_pad != n:
        x_slab = jnp.pad(x_slab, ((0, 0), (0, n_pad - n)))

    # Optional deeper input buffering (helps v5e if input DMA is exposed).
    x_kwargs = {}
    if input_buffers is not None and input_buffers != 2:
        x_kwargs["pipeline_mode"] = pl.Buffered(input_buffers)
    x_spec = pl.BlockSpec((IN_ROWS, tile_n), lambda i: (0, i), **x_kwargs)

    cost = pl.CostEstimate(
        flops=FLOPS_PER_POINT * n_pad,
        transcendentals=0,
        bytes_accessed=(IN_ROWS + OUT_PAD) * 4 * n_pad
                       + 4 * (SLAB_ROWS * 128 + SLAB_ROWS),
    )

    out = pl.pallas_call(
        _make_deform_kernel(DEFOR_D, NET_W),
        out_shape=jax.ShapeDtypeStruct((OUT_PAD, n_pad), jnp.float32),
        grid_spec=pltpu.PrefetchScalarGridSpec(
            num_scalar_prefetch=0,
            grid=(n_pad // tile_n,),
            in_specs=[
                x_spec,
                pl.BlockSpec(w_slab.shape, lambda i: (0, 0)),
                pl.BlockSpec(b_slab.shape, lambda i: (0, 0)),
            ],
            out_specs=pl.BlockSpec((OUT_PAD, tile_n), lambda i: (0, i)),
        ),
        compiler_params=pltpu.CompilerParams(
            dimension_semantics=("parallel",),
            vmem_limit_bytes=48 * 1024 * 1024,     # headroom; fits v7x's 64 MiB
        ),
        cost_estimate=cost,
    )(x_slab, w_slab, b_slab)

    return out[:, :n]


def deform_forward(w_slab, b_slab, anchor, feat, grid_offsets, grid_scaling,
                   dynamics, times_sel, *, tile_n=None, input_buffers=None):
    """PyTorch-layout compatibility wrapper (per-point inputs / outputs)."""
    n = anchor.shape[0]
    # NOTE: the original module also computes timenet(poc_fre(times)) and the
    # sin/cos part of poc_fre(anchor), but neither reaches the returned values
    # (deformation_net consumes anchor==point_emb[:, :3] and raw times_sel), so
    # that dead work is intentionally omitted here.
    slab = _build_input_slab(anchor, feat, grid_offsets, grid_scaling,
                             dynamics, times_sel)
    out = deform_forward_slab(w_slab, b_slab, slab,
                              tile_n=tile_n, input_buffers=input_buffers)
    outT = out[:OUT_REAL, :].T                    # single transpose pass
    pts   = outT[:, 0:3]
    featd = outT[:, 3:3 + FEAT_DIM]
    offd  = outT[:, 3 + FEAT_DIM:3 + FEAT_DIM + N_OFFSETS * 3].reshape(n, N_OFFSETS, 3)
    scald = outT[:, 3 + FEAT_DIM + N_OFFSETS * 3:OUT_REAL]
    return pts, featd, offd, scald


# --------------------------- pure-JAX reference ------------------------------
def ref_forward(params, anchor, feat, grid_offsets, grid_scaling, dynamics, times_sel):
    x = jnp.concatenate([anchor, times_sel[:, :1]], axis=-1)
    w0, b0 = params["trunk"][0]
    h = x @ w0.T + b0
    for i in range(1, DEFOR_D):
        wi, bi = params["trunk"][i]
        h = jnp.maximum(h, 0.0) @ wi.T + bi
    hr = jnp.maximum(h, 0.0)

    def head(k):
        (w1, b1), (w2, b2) = params["heads"][k]
        t = jnp.maximum(hr @ w1.T + b1, 0.0)
        return t @ w2.T + b2

    da = jnp.maximum(dynamics[:, 0:1], 0.0)
    df = jnp.maximum(dynamics[:, -1:], 0.0)
    pts   = anchor + head(0) * da
    featd = feat + head(1) * df
    offd  = grid_offsets.reshape(-1, N_OFFSETS * 3) + head(2) * df
    scald = grid_scaling + head(3) * df
    return pts, featd, offd.reshape(-1, N_OFFSETS, 3), scald


# ----------------------------------- main ------------------------------------
if __name__ == "__main__":
    key = jax.random.PRNGKey(0)
    kp, kdata = jax.random.split(key)
    params = init_params(kp)
    w_slab, b_slab = pack_params(params)

    fwd = jax.jit(deform_forward, static_argnames=("tile_n", "input_buffers"))

    # N=2048 -> auto tile 1024, grid of 2 (keeps both v7x TCs busy);
    # N=1000 exercises the padded-tail path.
    for N in (2048, 1000):
        ka, kf, ko, ks, kd, kt = jax.random.split(jax.random.fold_in(kdata, N), 6)
        anchor       = jax.random.normal(ka, (N, 3), jnp.float32)
        feat         = jax.random.normal(kf, (N, FEAT_DIM), jnp.float32)
        grid_offsets = jax.random.normal(ko, (N, N_OFFSETS, 3), jnp.float32)
        grid_scaling = jax.random.normal(ks, (N, 6), jnp.float32)
        dynamics     = jax.random.normal(kd, (N, 2), jnp.float32)
        times_sel    = jax.random.uniform(kt, (N, 1), jnp.float32)

        outs = fwd(w_slab, b_slab, anchor, feat, grid_offsets, grid_scaling,
                   dynamics, times_sel)
        outs = jax.block_until_ready(outs)

        refs = ref_forward(params, anchor, feat, grid_offsets, grid_scaling,
                           dynamics, times_sel)
        for o, r in zip(outs, refs):
            assert o.shape == r.shape and o.dtype == r.dtype
            assert float(jnp.max(jnp.abs(o - r))) < 2e-4

    print("KERNEL_OK")
</pallas_src>

<mosaic_0001>
module attributes {stable_mosaic.version = 11 : i64} {
  func.func @kernel(%arg0: i32, %arg1: memref<40x1024xf32, #tpu.memory_space<vmem>>, %arg2: memref<224x128xf32, #tpu.memory_space<vmem>>, %arg3: memref<224x1xf32, #tpu.memory_space<vmem>>, %arg4: memref<32x1024xf32, #tpu.memory_space<vmem>>) attributes {dimension_semantics = [#tpu.dimension_semantics<parallel>], iteration_bounds = array<i64: 2>, scalar_prefetch = 0 : i64, scratch_operands = 0 : i64, tpu.core_type = #tpu.core_type<tc>, window_params = [{transform_indices = @transform_0, window_bounds = array<i64: 40, 1024>}, {pipeline_mode = #tpu.pipeline_mode<synchronous>, transform_indices = @transform_1, window_bounds = array<i64: 224, 128>}, {pipeline_mode = #tpu.pipeline_mode<synchronous>, transform_indices = @transform_2, window_bounds = array<i64: 224, 1>}, {transform_indices = @transform_3, window_bounds = array<i64: 32, 1024>}]} {
    %c0 = arith.constant 0 : index
    %c0_0 = arith.constant 0 : index
    %0 = vector.load %arg1[%c0, %c0_0] : memref<40x1024xf32, #tpu.memory_space<vmem>>, vector<8x1024xf32>
    %c0_1 = arith.constant 0 : index
    %c0_2 = arith.constant 0 : index
    %1 = vector.load %arg2[%c0_1, %c0_2] : memref<224x128xf32, #tpu.memory_space<vmem>>, vector<32x8xf32>
    %cst = arith.constant dense<0.000000e+00> : vector<32x1024xf32>
    %2 = tpu.matmul %1, %0, %cst {dimension_numbers = #tpu.dot_dimension_numbers<[1], [0], [0], [1], [0, 0, 1, 1], [], []>} : vector<32x8xf32>, vector<8x1024xf32>, vector<32x1024xf32> -> vector<32x1024xf32>
    %c32 = arith.constant 32 : index
    %c0_3 = arith.constant 0 : index
    %3 = vector.load %arg2[%c32, %c0_3] : memref<224x128xf32, #tpu.memory_space<vmem>>, vector<32x32xf32>
    %cst_4 = arith.constant 0.000000e+00 : f32
    %4 = vector.broadcast %cst_4 : f32 to vector<32x1024xf32>
    %5 = arith.maximumf %2, %4 : vector<32x1024xf32>
    %cst_5 = arith.constant dense<0.000000e+00> : vector<32x1024xf32>
    %6 = tpu.matmul %3, %5, %cst_5 {dimension_numbers = #tpu.dot_dimension_numbers<[1], [0], [0], [1], [0, 0, 1, 1], [], []>} : vector<32x32xf32>, vector<32x1024xf32>, vector<32x1024xf32> -> vector<32x1024xf32>
    %c32_6 = arith.constant 32 : index
    %c0_7 = arith.constant 0 : index
    %7 = vector.load %arg3[%c32_6, %c0_7] : memref<224x1xf32, #tpu.memory_space<vmem>>, vector<32x1xf32>
    %8 = vector.broadcast %7 : vector<32x1xf32> to vector<32x1024xf32>
    %9 = arith.addf %6, %8 : vector<32x1024xf32>
    %cst_8 = arith.constant 0.000000e+00 : f32
    %10 = vector.broadcast %cst_8 : f32 to vector<32x1024xf32>
    %11 = arith.maximumf %9, %10 : vector<32x1024xf32>
    %c64 = arith.constant 64 : index
    %c0_9 = arith.constant 0 : index
    %12 = vector.load %arg2[%c64, %c0_9] : memref<224x128xf32, #tpu.memory_space<vmem>>, vector<128x32xf32>
    %cst_10 = arith.constant dense<0.000000e+00> : vector<128x1024xf32>
    %13 = tpu.matmul %12, %11, %cst_10 {dimension_numbers = #tpu.dot_dimension_numbers<[1], [0], [0], [1], [0, 0, 1, 1], [], []>} : vector<128x32xf32>, vector<32x1024xf32>, vector<128x1024xf32> -> vector<128x1024xf32>
    %c64_11 = arith.constant 64 : index
    %c0_12 = arith.constant 0 : index
    %14 = vector.load %arg3[%c64_11, %c0_12] : memref<224x1xf32, #tpu.memory_space<vmem>>, vector<128x1xf32>
    %15 = vector.broadcast %14 : vector<128x1xf32> to vector<128x1024xf32>
    %16 = arith.addf %13, %15 : vector<128x1024xf32>
    %c192 = arith.constant 192 : index
    %c0_13 = arith.constant 0 : index
    %17 = vector.load %arg2[%c192, %c0_13] : memref<224x128xf32, #tpu.memory_space<vmem>>, vector<32x128xf32>
    %cst_14 = arith.constant 0.000000e+00 : f32
    %18 = vector.broadcast %cst_14 : f32 to vector<128x1024xf32>
    %19 = arith.maximumf %16, %18 : vector<128x1024xf32>
    %cst_15 = arith.constant dense<0.000000e+00> : vector<32x1024xf32>
    %20 = tpu.matmul %17, %19, %cst_15 {dimension_numbers = #tpu.dot_dimension_numbers<[1], [0], [0], [1], [0, 0, 1, 1], [], []>} : vector<32x128xf32>, vector<128x1024xf32>, vector<32x1024xf32> -> vector<32x1024xf32>
    %c192_16 = arith.constant 192 : index
    %c0_17 = arith.constant 0 : index
    %21 = vector.load %arg3[%c192_16, %c0_17] : memref<224x1xf32, #tpu.memory_space<vmem>>, vector<32x1xf32>
    %22 = vector.broadcast %21 : vector<32x1xf32> to vector<32x1024xf32>
    %23 = arith.addf %20, %22 : vector<32x1024xf32>
    %24 = vector.extract_strided_slice %0 {offsets = [4, 0], sizes = [1, 1024], strides = [1, 1]} : vector<8x1024xf32> to vector<1x1024xf32>
    %cst_18 = arith.constant 0.000000e+00 : f32
    %25 = vector.broadcast %cst_18 : f32 to vector<1x1024xf32>
    %26 = arith.maximumf %24, %25 : vector<1x1024xf32>
    %27 = vector.extract_strided_slice %0 {offsets = [5, 0], sizes = [1, 1024], strides = [1, 1]} : vector<8x1024xf32> to vector<1x1024xf32>
    %cst_19 = arith.constant 0.000000e+00 : f32
    %28 = vector.broadcast %cst_19 : f32 to vector<1x1024xf32>
    %29 = arith.maximumf %27, %28 : vector<1x1024xf32>
    %c8 = arith.constant 8 : index
    %c0_20 = arith.constant 0 : index
    %30 = vector.load %arg1[%c8, %c0_20] : memref<40x1024xf32, #tpu.memory_space<vmem>>, vector<32x1024xf32>
    %31 = vector.broadcast %29 : vector<1x1024xf32> to vector<32x1024xf32>
    %32 = arith.mulf %23, %31 : vector<32x1024xf32>
    %33 = arith.addf %30, %32 : vector<32x1024xf32>
    %c0_21 = arith.constant 0 : index
    %c0_22 = arith.constant 0 : index
    %34 = vector.load %arg4[%c0_21, %c0_22] : memref<32x1024xf32, #tpu.memory_space<vmem>>, vector<32x1024xf32>
    tpu.vector_store %arg4[%c0_21, %c0_22], %33 {strides = array<i32>} : memref<32x1024xf32, #tpu.memory_space<vmem>>, vector<32x1024xf32>,
    %c8_23 = arith.constant 8 : index
    %c0_24 = arith.constant 0 : index
    %35 = vector.load %arg1[%c8_23, %c0_24] : memref<40x1024xf32, #tpu.memory_space<vmem>>, vector<3x1024xf32>
    %36 = vector.extract_strided_slice %23 {offsets = [0, 0], sizes = [3, 1024], strides = [1, 1]} : vector<32x1024xf32> to vector<3x1024xf32>
    %37 = vector.broadcast %26 : vector<1x1024xf32> to vector<3x1024xf32>
    %38 = arith.mulf %36, %37 : vector<3x1024xf32>
    %39 = arith.addf %35, %38 : vector<3x1024xf32>
    %c0_25 = arith.constant 0 : index
    %c0_26 = arith.constant 0 : index
    %40 = vector.load %arg4[%c0_25, %c0_26] : memref<32x1024xf32, #tpu.memory_space<vmem>>, vector<3x1024xf32>
    tpu.vector_store %arg4[%c0_25, %c0_26], %39 {strides = array<i32>} : memref<32x1024xf32, #tpu.memory_space<vmem>>, vector<3x1024xf32>,
    return
  }
  func.func @transform_0(%arg0: i32) -> (i32, i32) {
    %c0_i32 = arith.constant 0 : i32
    %c0_i32_0 = arith.constant 0 : i32
    return %c0_i32, %arg0 : i32, i32
  }
  func.func @transform_1(%arg0: i32) -> (i32, i32) {
    %c0_i32 = arith.constant 0 : i32
    %c0_i32_0 = arith.constant 0 : i32
    %c0_i32_1 = arith.constant 0 : i32
    return %c0_i32, %c0_i32_0 : i32, i32
  }
  func.func @transform_2(%arg0: i32) -> (i32, i32) {
    %c0_i32 = arith.constant 0 : i32
    %c0_i32_0 = arith.constant 0 : i32
    %c0_i32_1 = arith.constant 0 : i32
    return %c0_i32, %c0_i32_0 : i32, i32
  }
  func.func @transform_3(%arg0: i32) -> (i32, i32) {
    %c0_i32 = arith.constant 0 : i32
    %c0_i32_0 = arith.constant 0 : i32
    return %c0_i32, %arg0 : i32, i32
  }
}

</mosaic_0001>

<llo_original>
// kernel: deform_forward.1
$region0: #{deform_forward.1}
  #allocation0 [shape = 'u32[]', space=smem, size = 0x4, offset = 0x4, fixed_abs, tag = 'smem constant byte address 0x4 - core index']
  #allocation1 [shape = 'u32[144,128]{1,0:T(1,128)}', space=vmem, size = 0x12000, scoped, tag = 'internal scratch']
  %s0 = inlined_call_operand.vmem [shape: f32[40,2048], index: 0, kind: input, shape index: {}]
  %s1 = inlined_call_operand.vmem [shape: f32[224,128], index: 1, kind: input, shape index: {}]
  %s2 = inlined_call_operand.vmem [shape: f32[224,1], index: 2, kind: input, shape index: {}]
  %s3 = inlined_call_operand.vmem [shape: f32[32,2048], index: 3, kind: output, shape index: {}]
  %s4 = sld [smem:[#allocation0]]
  $region87: #{deform_forward.1} parent=0
    _
  %s6 = ssub.s32 1, %s4
  %s7 = scalar_select 0, %s6, %s4
  $region1: #{deform_forward.1} parent=0
    #allocation2 [shape = 'u8[327680]{0}', space=vmem, size = 0x50000, scoped, tag = 'input window, operand 0']
    #allocation3 [shape = 'u8[262144]{0}', space=vmem, size = 0x40000, scoped, tag = 'output window, operand 0']
    loop: start=0, step=1, limit=4
    $region2: #{deform_forward.1} parent=1 // loop_pre_header
      _
    $region3: #{deform_forward.1} parent=1 // loop_header
      %s9 = sphi 0, %s13
      %p10 = scmp.ge.s32.totalorder %s9, 4
      %s19 = sphi 0, %s21
      %s22 = sphi 0, %s19
      %s23 = sphi 0, %s22
      %s39 = sphi 0, %s23
      %s43 = sphi 0, %s43
      %s45 = sphi 0, %s43
      %s46 = sphi 0, %s45
      %s60 = sphi 0, %s46
      %s64 = sphi 0, %s64
      %s66 = sphi 0, %s64
      %s67 = sphi 0, %s66
      %s81 = sphi 0, %s67
      %s87 = sphi 0, %s89
      %s90 = sphi 0, %s87
      %s91 = sphi 0, %s90
      %s107 = sphi 0, %s91
    $region4: #{deform_forward.1} parent=1 // loop_header_branch
      %12 = sbr.rel (%p10) target = $region8
    $region5: #{deform_forward.1} parent=1 // loop_body
      %s14 = ssub.s32 %s9, 1
      %s15 = ssub.s32 %s9, 2
      %s16 = sadd.s32 %s9, 1
      %s17 = ssub.s32 %s9, %s16
      %p18 = scmp.eq.s32.totalorder %s17, 0
      %s20 = sadd.s32 %s19, 1
      %s21 = scalar_select %p18, %s19, %s20
      %p24 = pneg %p18
      %p25 = scmp.eq.s32.totalorder %s9, 1
      %p26 = por %p24, %p25
      %p27 = scmp.ne.s32.totalorder %s19, %s22
      %p28 = scmp.eq.s32.totalorder %s9, 0
      %p29 = por %p27, %p28
      %p30 = scmp.ne.s32.totalorder %s19, %s22
      %p31 = scmp.eq.s32.totalorder %s14, 1
      %p32 = por %p30, %p31
      %p33 = scmp.ne.s32.totalorder %s22, %s23
      %p34 = scmp.eq.s32.totalorder %s14, 0
      %p35 = por %p33, %p34
      %p36 = scmp.ne.s32.totalorder %s22, %s23
      %p37 = scmp.eq.s32.totalorder %s15, 1
      %p38 = por %p36, %p37
      %p40 = scmp.ne.s32.totalorder %s23, %s39
      %p41 = scmp.eq.s32.totalorder %s15, 0
      %p42 = por %p40, %p41
      %s44 = sadd.s32 %s43, 1
      %p47 = scmp.eq.s32.totalorder %s9, 1
      %p48 = scmp.ne.s32.totalorder %s43, %s45
      %p49 = scmp.eq.s32.totalorder %s9, 0
      %p50 = por %p48, %p49
      %p51 = scmp.ne.s32.totalorder %s43, %s45
      %p52 = scmp.eq.s32.totalorder %s14, 1
      %p53 = por %p51, %p52
      %p54 = scmp.ne.s32.totalorder %s45, %s46
      %p55 = scmp.eq.s32.totalorder %s14, 0
      %p56 = por %p54, %p55
      %p57 = scmp.ne.s32.totalorder %s45, %s46
      %p58 = scmp.eq.s32.totalorder %s15, 1
      %p59 = por %p57, %p58
      %p61 = scmp.ne.s32.totalorder %s46, %s60
      %p62 = scmp.eq.s32.totalorder %s15, 0
      %p63 = por %p61, %p62
      %s65 = sadd.s32 %s64, 1
      %p68 = scmp.eq.s32.totalorder %s9, 1
      %p69 = scmp.ne.s32.totalorder %s64, %s66
      %p70 = scmp.eq.s32.totalorder %s9, 0
      %p71 = por %p69, %p70
      %p72 = scmp.ne.s32.totalorder %s64, %s66
      %p73 = scmp.eq.s32.totalorder %s14, 1
      %p74 = por %p72, %p73
      %p75 = scmp.ne.s32.totalorder %s66, %s67
      %p76 = scmp.eq.s32.totalorder %s14, 0
      %p77 = por %p75, %p76
      %p78 = scmp.ne.s32.totalorder %s66, %s67
      %p79 = scmp.eq.s32.totalorder %s15, 1
      %p80 = por %p78, %p79
      %p82 = scmp.ne.s32.totalorder %s67, %s81
      %p83 = scmp.eq.s32.totalorder %s15, 0
      %p84 = por %p82, %p83
      %s85 = ssub.s32 %s9, %s16
      %p86 = scmp.eq.s32.totalorder %s85, 0
      %s88 = sadd.s32 %s87, 1
      %s89 = scalar_select %p86, %s87, %s88
      %p92 = pneg %p86
      %p93 = scmp.eq.s32.totalorder %s9, 1
      %p94 = por %p92, %p93
      %p95 = scmp.ne.s32.totalorder %s87, %s90
      %p96 = scmp.eq.s32.totalorder %s9, 0
      %p97 = por %p95, %p96
      %p98 = scmp.ne.s32.totalorder %s87, %s90
      %p99 = scmp.eq.s32.totalorder %s14, 1
      %p100 = por %p98, %p99
      %p101 = scmp.ne.s32.totalorder %s90, %s91
      %p102 = scmp.eq.s32.totalorder %s14, 0
      %p103 = por %p101, %p102
      %p104 = scmp.ne.s32.totalorder %s90, %s91
      %p105 = scmp.eq.s32.totalorder %s15, 1
      %p106 = por %p104, %p105
      %p108 = scmp.ne.s32.totalorder %s91, %s107
      %p109 = scmp.eq.s32.totalorder %s15, 0
      %p110 = por %p108, %p109
      %p111 = scmp.le.s32.totalorder 1, %s9
      %p112 = scmp.lt.s32.totalorder %s9, 3
      %p113 = pnand %p111, %p112
      %p114 = pneg %p113
      // Predicated region
      $region9: #{deform_forward.1} parent=5 // pred_check
        _
      $region10: #{deform_forward.1} parent=5 // pred_check_branch
        %116 = sbr.rel (%p113) target = $region12
      $region11: #{deform_forward.1} parent=5 // pred_region
        %s117 = ssub.s32 %s9, 1
        // Predicated region
        $region13: #{deform_forward.1} parent=11 // pred_check
          %p118 = pneg %p56
        $region14: #{deform_forward.1} parent=11 // pred_check_branch
          %120 = sbr.rel (%p118) target = $region16
        $region15: #{deform_forward.1} parent=11 // pred_region
          _
        $region16: #{deform_forward.1} parent=11 // pred_fallthru
          _
        // Predicated region
        $region17: #{deform_forward.1} parent=11 // pred_check
          %p121 = pneg %p77
        $region18: #{deform_forward.1} parent=11 // pred_check_branch
          %123 = sbr.rel (%p121) target = $region20
        $region19: #{deform_forward.1} parent=11 // pred_region
          _
        $region20: #{deform_forward.1} parent=11 // pred_fallthru
          _
      $region12: #{deform_forward.1} parent=5 // pred_fallthru
        _
      %p124 = scmp.lt.s32.totalorder %s9, 2
      // Predicated region
      $region21: #{deform_forward.1} parent=5 // pred_check
        %p125 = pneg %p124
      $region22: #{deform_forward.1} parent=5 // pred_check_branch
        %127 = sbr.rel (%p125) target = $region24
      $region23: #{deform_forward.1} parent=5 // pred_region
        // Predicated region
        $region25: #{deform_forward.1} parent=23 // pred_check
          %p128 = pneg %p29
        $region26: #{deform_forward.1} parent=23 // pred_check_branch
          %130 = sbr.rel (%p128) target = $region28
        $region27: #{deform_forward.1} parent=23 // pred_region
          %s131 = sand.u32 %s19, 1
          %s132 = sand.u32 %s19, 1
          %s133 = smul.addr %s132, 320
          %s134 = scalar_lea.vmem [#allocation2], %s133
          %s135 = smul.u32 8, %s9
          %s136 = smul.addr %s135, 8
          %s137 = scalar_lea.vmem %s0, %s136
          // Predicated region
          $region29: #{deform_forward.1} parent=27 // pred_check
            _
          $region30: #{deform_forward.1} parent=27 // pred_check_branch
            %139 = sbr.rel (0) target = $region32
          $region31: #{deform_forward.1} parent=27 // pred_region
            // Predicated region
            $region33: #{deform_forward.1} parent=31 // pred_check
              _
            $region34: #{deform_forward.1} parent=31 // pred_check_branch
              %141 = sbr.rel (0) target = $region36
            $region35: #{deform_forward.1} parent=31 // pred_region
              loop: start=0, step=1, limit=1
              $region37: #{deform_forward.1} parent=35 // loop_pre_header
                _
              $region38: #{deform_forward.1} parent=35 // loop_header
                %s143 = sphi 0, %s147
                %p144 = scmp.ge.s32.totalorder %s143, 1
                %s148 = sphi %s137, %s137
                %s149 = sphi %s134, %s134
              $region39: #{deform_forward.1} parent=35 // loop_header_branch
                %146 = sbr.rel (%p144) target = $region43
              $region40: #{deform_forward.1} parent=35 // loop_body
                %v150 = vld [vmem:[%s148] sm:$0xff]
                %151 = vst [vmem:[%s149] sm:$0xff] %v150
                %v152 = vld [vmem:[%s148 + $0x8] sm:$0xff]
                %153 = vst [vmem:[%s149 + $0x8] sm:$0xff] %v152
                %v154 = vld [vmem:[%s148 + $0x10] sm:$0xff]
                %155 = vst [vmem:[%s149 + $0x10] sm:$0xff] %v154
                %v156 = vld [vmem:[%s148 + $0x18] sm:$0xff]
                %157 = vst [vmem:[%s149 + $0x18] sm:$0xff] %v156
                %v158 = vld [vmem:[%s148 + $0x20] sm:$0xff]
                %159 = vst [vmem:[%s149 + $0x20] sm:$0xff] %v158
                %v160 = vld [vmem:[%s148 + $0x28] sm:$0xff]
                %161 = vst [vmem:[%s149 + $0x28] sm:$0xff] %v160
                %v162 = vld [vmem:[%s148 + $0x30] sm:$0xff]
                %163 = vst [vmem:[%s149 + $0x30] sm:$0xff] %v162
                %v164 = vld [vmem:[%s148 + $0x38] sm:$0xff]
                %165 = vst [vmem:[%s149 + $0x38] sm:$0xff] %v164
                %v166 = vld [vmem:[%s148 + $0x80] sm:$0xff]
                %167 = vst [vmem:[%s149 + $0x40] sm:$0xff] %v166
                %v168 = vld [vmem:[%s148 + $0x88] sm:$0xff]
                %169 = vst [vmem:[%s149 + $0x48] sm:$0xff] %v168
                %v170 = vld [vmem:[%s148 + $0x90] sm:$0xff]
                %171 = vst [vmem:[%s149 + $0x50] sm:$0xff] %v170
                %v172 = vld [vmem:[%s148 + $0x98] sm:$0xff]
                %173 = vst [vmem:[%s149 + $0x58] sm:$0xff] %v172
                %v174 = vld [vmem:[%s148 + $0xa0] sm:$0xff]
                %175 = vst [vmem:[%s149 + $0x60] sm:$0xff] %v174
                %v176 = vld [vmem:[%s148 + $0xa8] sm:$0xff]
                %177 = vst [vmem:[%s149 + $0x68] sm:$0xff] %v176
                %v178 = vld [vmem:[%s148 + $0xb0] sm:$0xff]
                %179 = vst [vmem:[%s149 + $0x70] sm:$0xff] %v178
                %v180 = vld [vmem:[%s148 + $0xb8] sm:$0xff]
                %181 = vst [vmem:[%s149 + $0x78] sm:$0xff] %v180
                %v182 = vld [vmem:[%s148 + $0x100] sm:$0xff]
                %183 = vst [vmem:[%s149 + $0x80] sm:$0xff] %v182
                %v184 = vld [vmem:[%s148 + $0x108] sm:$0xff]
                %185 = vst [vmem:[%s149 + $0x88] sm:$0xff] %v184
                %v186 = vld [vmem:[%s148 + $0x110] sm:$0xff]
                %187 = vst [vmem:[%s149 + $0x90] sm:$0xff] %v186
                %v188 = vld [vmem:[%s148 + $0x118] sm:$0xff]
                %189 = vst [vmem:[%s149 + $0x98] sm:$0xff] %v188
                %v190 = vld [vmem:[%s148 + $0x120] sm:$0xff]
                %191 = vst [vmem:[%s149 + $0xa0] sm:$0xff] %v190
                %v192 = vld [vmem:[%s148 + $0x128] sm:$0xff]
                %193 = vst [vmem:[%s149 + $0xa8] sm:$0xff] %v192
                %v194 = vld [vmem:[%s148 + $0x130] sm:$0xff]
                %195 = vst [vmem:[%s149 + $0xb0] sm:$0xff] %v194
                %v196 = vld [vmem:[%s148 + $0x138] sm:$0xff]
                %197 = vst [vmem:[%s149 + $0xb8] sm:$0xff] %v196
                %v198 = vld [vmem:[%s148 + $0x180] sm:$0xff]
                %199 = vst [vmem:[%s149 + $0xc0] sm:$0xff] %v198
                %v200 = vld [vmem:[%s148 + $0x188] sm:$0xff]
                %201 = vst [vmem:[%s149 + $0xc8] sm:$0xff] %v200
                %v202 = vld [vmem:[%s148 + $0x190] sm:$0xff]
                %203 = vst [vmem:[%s149 + $0xd0] sm:$0xff] %v202
                %v204 = vld [vmem:[%s148 + $0x198] sm:$0xff]
                %205 = vst [vmem:[%s149 + $0xd8] sm:$0xff] %v204
                %v206 = vld [vmem:[%s148 + $0x1a0] sm:$0xff]
                %207 = vst [vmem:[%s149 + $0xe0] sm:$0xff] %v206
                %v208 = vld [vmem:[%s148 + $0x1a8] sm:$0xff]
                %209 = vst [vmem:[%s149 + $0xe8] sm:$0xff] %v208
                %v210 = vld [vmem:[%s148 + $0x1b0] sm:$0xff]
                %211 = vst [vmem:[%s149 + $0xf0] sm:$0xff] %v210
                %v212 = vld [vmem:[%s148 + $0x1b8] sm:$0xff]
                %213 = vst [vmem:[%s149 + $0xf8] sm:$0xff] %v212
                %v214 = vld [vmem:[%s148 + $0x200] sm:$0xff]
                %215 = vst [vmem:[%s149 + $0x100] sm:$0xff] %v214
                %v216 = vld [vmem:[%s148 + $0x208] sm:$0xff]
                %217 = vst [vmem:[%s149 + $0x108] sm:$0xff] %v216
                %v218 = vld [vmem:[%s148 + $0x210] sm:$0xff]
                %219 = vst [vmem:[%s149 + $0x110] sm:$0xff] %v218
                %v220 = vld [vmem:[%s148 + $0x218] sm:$0xff]
                %221 = vst [vmem:[%s149 + $0x118] sm:$0xff] %v220
                %v222 = vld [vmem:[%s148 + $0x220] sm:$0xff]
                %223 = vst [vmem:[%s149 + $0x120] sm:$0xff] %v222
                %v224 = vld [vmem:[%s148 + $0x228] sm:$0xff]
                %225 = vst [vmem:[%s149 + $0x128] sm:$0xff] %v224
                %v226 = vld [vmem:[%s148 + $0x230] sm:$0xff]
                %227 = vst [vmem:[%s149 + $0x130] sm:$0xff] %v226
                %v228 = vld [vmem:[%s148 + $0x238] sm:$0xff]
                %229 = vst [vmem:[%s149 + $0x138] sm:$0xff] %v228
              $region41: #{deform_forward.1} parent=35 // loop_footer
                %s147 = sadd.s32 1, %s143
              $region42: #{deform_forward.1} parent=35 // loop_footer_branch
                %142 = sbr.rel target = $region38
              $region43: #{deform_forward.1} parent=35 // loop_exit
                _
            $region36: #{deform_forward.1} parent=31 // pred_fallthru
              _
            // Predicated region
            $region44: #{deform_forward.1} parent=31 // pred_check
              _
            $region45: #{deform_forward.1} parent=31 // pred_check_branch
              %231 = sbr.rel target = $region47
            $region46: #{deform_forward.1} parent=31 // pred_region
              _
            $region47: #{deform_forward.1} parent=31 // pred_fallthru
              _
          $region32: #{deform_forward.1} parent=27 // pred_fallthru
            _
          %232 = vnop
        $region28: #{deform_forward.1} parent=23 // pred_fallthru
          _
      $region24: #{deform_forward.1} parent=5 // pred_fallthru
        _
      %p233 = scmp.le.s32.totalorder 1, %s9
      %p234 = scmp.lt.s32.totalorder %s9, 3
      %p235 = pnand %p233, %p234
      %p236 = pneg %p235
      // Predicated region
      $region48: #{deform_forward.1} parent=5 // pred_check
        _
      $region49: #{deform_forward.1} parent=5 // pred_check_branch
        %238 = sbr.rel (%p235) target = $region51
      $region50: #{deform_forward.1} parent=5 // pred_region
        %s239 = ssub.s32 %s9, 1
        %s240 = sand.u32 %s22, 1
        %s241 = sand.u32 %s22, 1
        %s242 = smul.addr %s241, 320
        %s243 = scalar_lea.vmem [#allocation2], %s242
        // Predicated region
        $region52: #{deform_forward.1} parent=50 // pred_check
          %p244 = pneg %p35
        $region53: #{deform_forward.1} parent=50 // pred_check_branch
          %246 = sbr.rel (%p244) target = $region55
        $region54: #{deform_forward.1} parent=50 // pred_region
          _
        $region55: #{deform_forward.1} parent=50 // pred_fallthru
          _
        %s247 = sand.u32 %s22, 1
        %s248 = sand.u32 %s22, 1
        %s249 = smul.addr %s248, 320
        %s250 = scalar_lea.vmem [#allocation2], %s249
        %p251 = pneg %p35
        %p252 = pneg %p32
        %p253 = pneg %p56
        %p254 = pneg %p53
        %p255 = pneg %p77
        %p256 = pneg %p74
        %p257 = pneg %p103
        %p258 = pneg %p100
        %s259 = sand.u32 %s90, 1
        %s260 = sand.u32 %s90, 1
        %s261 = smul.addr %s260, 256
        %s262 = scalar_lea.vmem [#allocation3], %s261
        %s263 = smul.u32 8, %s14
        %s264 = smul.u32 8, %s14
        %v265 = vld [vmem:[%s243] sm:$0xff]
        %v266 = vld [vmem:[%s243 + $0x8] sm:$0xff]
        %v267 = vld [vmem:[%s243 + $0x10] sm:$0xff]
        %v268 = vld [vmem:[%s243 + $0x18] sm:$0xff]
        %v269 = vld [vmem:[%s243 + $0x20] sm:$0xff]
        %v270 = vld [vmem:[%s243 + $0x28] sm:$0xff]
        %v271 = vld [vmem:[%s243 + $0x30] sm:$0xff]
        %v272 = vld [vmem:[%s243 + $0x38] sm:$0xff]
        %v273 = vld [vmem:[%s1] sm:$0xff]
        %v274 = vld [vmem:[%s1 + $0x8] sm:$0xff]
        %v275 = vld [vmem:[%s1 + $0x10] sm:$0xff]
        %v276 = vld [vmem:[%s1 + $0x18] sm:$0xff]
        %vm277 = vcmask 64512
        %v279 = vsel %vm277, %v273, 0
        %v282 = vsel %vm277, %v274, 0
        %v285 = vsel %vm277, %v275, 0
        %v288 = vsel %vm277, %v276, 0
        %290 = vmatprep.subr.mxu0 %v266
        %291 = vmatpush1.msra.mxu0 %v265
        %292 = vmatprep.subr.mxu0 0.0
        %293 = vmatpush1.msra.mxu0 0.0
        %294 = vmatprep.subr.mxu0 0.0
        %295 = vmatpush1.msra.mxu0 0.0
        %296 = vmatprep.subr.mxu0 0.0
        %297 = vmatpush1.msra.mxu0 0.0
        %298 = vmatprep.subr.mxu0 0.0
        %299 = vmatpush1.msra.mxu0 0.0
        %300 = vmatprep.subr.mxu0 0.0
        %301 = vmatpush1.msra.mxu0 0.0
        %302 = vmatprep.subr.mxu0 0.0
        %303 = vmatpush1.msra.mxu0 0.0
        %304 = vmatprep.subr.mxu0 0.0
        %305 = vmatpush1.msra.mxu0 0.0
        %306 = vmatprep.subr.mxu0 0.0
        %307 = vmatpush1.msra.mxu0 0.0
        %308 = vmatprep.subr.mxu0 0.0
        %309 = vmatpush1.msra.mxu0 0.0
        %310 = vmatprep.subr.mxu0 0.0
        %311 = vmatpush1.msra.mxu0 0.0
        %312 = vmatprep.subr.mxu0 0.0
        %313 = vmatpush1.msra.mxu0 0.0
        %314 = vmatprep.subr.mxu0 0.0
        %315 = vmatpush1.msra.mxu0 0.0
        %316 = vmatprep.subr.mxu0 0.0
        %317 = vmatpush1.msra.mxu0 0.0
        %318 = vmatprep.subr.mxu0 0.0
        %319 = vmatpush1.msra.mxu0 0.0
        %320 = vmatprep.subr.mxu0 0.0
        %321 = vmatpush1.msra.mxu0 0.0
        %322 = vmatprep.subr.mxu0 0.0
        %323 = vmatpush1.msra.mxu0 0.0
        %324 = vmatprep.subr.mxu0 0.0
        %325 = vmatpush1.msra.mxu0 0.0
        %326 = vmatprep.subr.mxu0 0.0
        %327 = vmatpush1.msra.mxu0 0.0
        %328 = vmatprep.subr.mxu0 0.0
        %329 = vmatpush1.msra.mxu0 0.0
        %330 = vmatprep.subr.mxu0 0.0
        %331 = vmatpush1.msra.mxu0 0.0
        %332 = vmatprep.subr.mxu0 0.0
        %333 = vmatpush1.msra.mxu0 0.0
        %334 = vmatprep.subr.mxu0 0.0
        %335 = vmatpush1.msra.mxu0 0.0
        %336 = vmatprep.subr.mxu0 0.0
        %337 = vmatpush1.msra.mxu0 0.0
        %338 = vmatprep.subr.mxu0 0.0
        %339 = vmatpush1.msra.mxu0 0.0
        %340 = vmatprep.subr.mxu0 0.0
        %341 = vmatpush1.msra.mxu0 0.0
        %342 = vmatprep.subr.mxu0 0.0
        %343 = vmatpush1.msra.mxu0 0.0
        %344 = vmatprep.subr.mxu0 0.0
        %345 = vmatpush1.msra.mxu0 0.0
        %346 = vmatprep.subr.mxu0 0.0
        %347 = vmatpush1.msra.mxu0 0.0
        %348 = vmatprep.subr.mxu0 0.0
        %349 = vmatpush1.msra.mxu0 0.0
        %350 = vmatprep.subr.mxu0 0.0
        %351 = vmatpush1.msra.mxu0 0.0
        %352 = vmatprep.subr.mxu0 0.0
        %353 = vmatpush1.msra.mxu0 0.0
        %354 = vmatprep.mubr.f32.mxu0 0.0
        %355 = vmatmul.mubr.f32.gmra.mrb[0].mxu0 %v279
        %v356 = vpop.f32.mrb[0].mxu0
        %v357 = vadd.f32 0.0, %v356
        %v358 = vpop.f32.mrb[0].mxu0
        %v359 = vadd.f32 0.0, %v358
        %360 = vmatprep.mubr.f32.mxu0 0.0
        %361 = vmatmul.mubr.f32.gmra.mrb[0].mxu0 %v282
        %v362 = vpop.f32.mrb[0].mxu0
        %v363 = vadd.f32 0.0, %v362
        %v364 = vpop.f32.mrb[0].mxu0
        %v365 = vadd.f32 0.0, %v364
        %366 = vmatprep.mubr.f32.mxu0 0.0
        %367 = vmatmul.mubr.f32.gmra.mrb[0].mxu0 %v285
        %v368 = vpop.f32.mrb[0].mxu0
        %v369 = vadd.f32 0.0, %v368
        %v370 = vpop.f32.mrb[0].mxu0
        %v371 = vadd.f32 0.0, %v370
        %372 = vmatprep.mubr.f32.mxu0 0.0
        %373 = vmatmul.mubr.f32.gmra.mrb[0].mxu0 %v288
        %v374 = vpop.f32.mrb[0].mxu0
        %v375 = vadd.f32 0.0, %v374
        %v376 = vpop.f32.mrb[0].mxu0
        %v377 = vadd.f32 0.0, %v376
        %378 = vdwg.mxu0
        %379 = vmatprep.subr.mxu0 %v268
        %380 = vmatpush1.msra.mxu0 %v267
        %381 = vmatprep.subr.mxu0 0.0
        %382 = vmatpush1.msra.mxu0 0.0
        %383 = vmatprep.subr.mxu0 0.0
        %384 = vmatpush1.msra.mxu0 0.0
        %385 = vmatprep.subr.mxu0 0.0
        %386 = vmatpush1.msra.mxu0 0.0
        %387 = vmatprep.subr.mxu0 0.0
        %388 = vmatpush1.msra.mxu0 0.0
        %389 = vmatprep.subr.mxu0 0.0
        %390 = vmatpush1.msra.mxu0 0.0
        %391 = vmatprep.subr.mxu0 0.0
        %392 = vmatpush1.msra.mxu0 0.0
        %393 = vmatprep.subr.mxu0 0.0
        %394 = vmatpush1.msra.mxu0 0.0
        %395 = vmatprep.subr.mxu0 0.0
        %396 = vmatpush1.msra.mxu0 0.0
        %397 = vmatprep.subr.mxu0 0.0
        %398 = vmatpush1.msra.mxu0 0.0
        %399 = vmatprep.subr.mxu0 0.0
        %400 = vmatpush1.msra.mxu0 0.0
        %401 = vmatprep.subr.mxu0 0.0
        %402 = vmatpush1.msra.mxu0 0.0
        %403 = vmatprep.subr.mxu0 0.0
        %404 = vmatpush1.msra.mxu0 0.0
        %405 = vmatprep.subr.mxu0 0.0
        %406 = vmatpush1.msra.mxu0 0.0
        %407 = vmatprep.subr.mxu0 0.0
        %408 = vmatpush1.msra.mxu0 0.0
        %409 = vmatprep.subr.mxu0 0.0
        %410 = vmatpush1.msra.mxu0 0.0
        %411 = vmatprep.subr.mxu0 0.0
        %412 = vmatpush1.msra.mxu0 0.0
        %413 = vmatprep.subr.mxu0 0.0
        %414 = vmatpush1.msra.mxu0 0.0
        %415 = vmatprep.subr.mxu0 0.0
        %416 = vmatpush1.msra.mxu0 0.0
        %417 = vmatprep.subr.mxu0 0.0
        %418 = vmatpush1.msra.mxu0 0.0
        %419 = vmatprep.subr.mxu0 0.0
        %420 = vmatpush1.msra.mxu0 0.0
        %421 = vmatprep.subr.mxu0 0.0
        %422 = vmatpush1.msra.mxu0 0.0
        %423 = vmatprep.subr.mxu0 0.0
        %424 = vmatpush1.msra.mxu0 0.0
        %425 = vmatprep.subr.mxu0 0.0
        %426 = vmatpush1.msra.mxu0 0.0
        %427 = vmatprep.subr.mxu0 0.0
        %428 = vmatpush1.msra.mxu0 0.0
        %429 = vmatprep.subr.mxu0 0.0
        %430 = vmatpush1.msra.mxu0 0.0
        %431 = vmatprep.subr.mxu0 0.0
        %432 = vmatpush1.msra.mxu0 0.0
        %433 = vmatprep.subr.mxu0 0.0
        %434 = vmatpush1.msra.mxu0 0.0
        %435 = vmatprep.subr.mxu0 0.0
        %436 = vmatpush1.msra.mxu0 0.0
        %437 = vmatprep.subr.mxu0 0.0
        %438 = vmatpush1.msra.mxu0 0.0
        %439 = vmatprep.subr.mxu0 0.0
        %440 = vmatpush1.msra.mxu0 0.0
        %441 = vmatprep.subr.mxu0 0.0
        %442 = vmatpush1.msra.mxu0 0.0
        %443 = vmatprep.mubr.f32.mxu0 0.0
        %444 = vmatmul.mubr.f32.gmra.mrb[0].mxu0 %v279
        %v445 = vpop.f32.mrb[0].mxu0
        %v446 = vadd.f32 0.0, %v445
        %v447 = vpop.f32.mrb[0].mxu0
        %v448 = vadd.f32 0.0, %v447
        %449 = vmatprep.mubr.f32.mxu0 0.0
        %450 = vmatmul.mubr.f32.gmra.mrb[0].mxu0 %v282
        %v451 = vpop.f32.mrb[0].mxu0
        %v452 = vadd.f32 0.0, %v451
        %v453 = vpop.f32.mrb[0].mxu0
        %v454 = vadd.f32 0.0, %v453
        %455 = vmatprep.mubr.f32.mxu0 0.0
        %456 = vmatmul.mubr.f32.gmra.mrb[0].mxu0 %v285
        %v457 = vpop.f32.mrb[0].mxu0
        %v458 = vadd.f32 0.0, %v457
        %v459 = vpop.f32.mrb[0].mxu0
        %v460 = vadd.f32 0.0, %v459
        %461 = vmatprep.mubr.f32.mxu0 0.0
        %462 = vmatmul.mubr.f32.gmra.mrb[0].mxu0 %v288
        %v463 = vpop.f32.mrb[0].mxu0
        %v464 = vadd.f32 0.0, %v463
        %v465 = vpop.f32.mrb[0].mxu0
        %v466 = vadd.f32 0.0, %v465
        %467 = vdwg.mxu0
        %468 = vmatprep.subr.mxu0 %v270
        %469 = vmatpush1.msra.mxu0 %v269
        %470 = vmatprep.subr.mxu0 0.0
        %471 = vmatpush1.msra.mxu0 0.0
        %472 = vmatprep.subr.mxu0 0.0
        %473 = vmatpush1.msra.mxu0 0.0
        %474 = vmatprep.subr.mxu0 0.0
        %475 = vmatpush1.msra.mxu0 0.0
        %476 = vmatprep.subr.mxu0 0.0
        %477 = vmatpush1.msra.mxu0 0.0
        %478 = vmatprep.subr.mxu0 0.0
        %479 = vmatpush1.msra.mxu0 0.0
        %480 = vmatprep.subr.mxu0 0.0
        %481 = vmatpush1.msra.mxu0 0.0
        %482 = vmatprep.subr.mxu0 0.0
        %483 = vmatpush1.msra.mxu0 0.0
        %484 = vmatprep.subr.mxu0 0.0
        %485 = vmatpush1.msra.mxu0 0.0
        %486 = vmatprep.subr.mxu0 0.0
        %487 = vmatpush1.msra.mxu0 0.0
        %488 = vmatprep.subr.mxu0 0.0
        %489 = vmatpush1.msra.mxu0 0.0
        %490 = vmatprep.subr.mxu0 0.0
        %491 = vmatpush1.msra.mxu0 0.0
        %492 = vmatprep.subr.mxu0 0.0
        %493 = vmatpush1.msra.mxu0 0.0
        %494 = vmatprep.subr.mxu0 0.0
        %495 = vmatpush1.msra.mxu0 0.0
        %496 = vmatprep.subr.mxu0 0.0
        %497 = vmatpush1.msra.mxu0 0.0
        %498 = vmatprep.subr.mxu0 0.0
        %499 = vmatpush1.msra.mxu0 0.0
        %500 = vmatprep.subr.mxu0 0.0
        %501 = vmatpush1.msra.mxu0 0.0
        %502 = vmatprep.subr.mxu0 0.0
        %503 = vmatpush1.msra.mxu0 0.0
        %504 = vmatprep.subr.mxu0 0.0
        %505 = vmatpush1.msra.mxu0 0.0
        %506 = vmatprep.subr.mxu0 0.0
        %507 = vmatpush1.msra.mxu0 0.0
        %508 = vmatprep.subr.mxu0 0.0
        %509 = vmatpush1.msra.mxu0 0.0
        %510 = vmatprep.subr.mxu0 0.0
        %511 = vmatpush1.msra.mxu0 0.0
        %512 = vmatprep.subr.mxu0 0.0
        %513 = vmatpush1.msra.mxu0 0.0
        %514 = vmatprep.subr.mxu0 0.0
        %515 = vmatpush1.msra.mxu0 0.0
        %516 = vmatprep.subr.mxu0 0.0
        %517 = vmatpush1.msra.mxu0 0.0
        %518 = vmatprep.subr.mxu0 0.0
        %519 = vmatpush1.msra.mxu0 0.0
        %520 = vmatprep.subr.mxu0 0.0
        %521 = vmatpush1.msra.mxu0 0.0
        %522 = vmatprep.subr.mxu0 0.0
        %523 = vmatpush1.msra.mxu0 0.0
        %524 = vmatprep.subr.mxu0 0.0
        %525 = vmatpush1.msra.mxu0 0.0
        %526 = vmatprep.subr.mxu0 0.0
        %527 = vmatpush1.msra.mxu0 0.0
        %528 = vmatprep.subr.mxu0 0.0
        %529 = vmatpush1.msra.mxu0 0.0
        %530 = vmatprep.subr.mxu0 0.0
        %531 = vmatpush1.msra.mxu0 0.0
        %532 = vmatprep.mubr.f32.mxu0 0.0
        %533 = vmatmul.mubr.f32.gmra.mrb[0].mxu0 %v279
        %v534 = vpop.f32.mrb[0].mxu0
        %v535 = vadd.f32 0.0, %v534
        %v536 = vpop.f32.mrb[0].mxu0
        %v537 = vadd.f32 0.0, %v536
        %538 = vmatprep.mubr.f32.mxu0 0.0
        %539 = vmatmul.mubr.f32.gmra.mrb[0].mxu0 %v282
        %v540 = vpop.f32.mrb[0].mxu0
        %v541 = vadd.f32 0.0, %v540
        %v542 = vpop.f32.mrb[0].mxu0
        %v543 = vadd.f32 0.0, %v542
        %544 = vmatprep.mubr.f32.mxu0 0.0
        %545 = vmatmul.mubr.f32.gmra.mrb[0].mxu0 %v285
        %v546 = vpop.f32.mrb[0].mxu0
        %v547 = vadd.f32 0.0, %v546
        %v548 = vpop.f32.mrb[0].mxu0
        %v549 = vadd.f32 0.0, %v548
        %550 = vmatprep.mubr.f32.mxu0 0.0
        %551 = vmatmul.mubr.f32.gmra.mrb[0].mxu0 %v288
        %v552 = vpop.f32.mrb[0].mxu0
        %v553 = vadd.f32 0.0, %v552
        %v554 = vpop.f32.mrb[0].mxu0
        %v555 = vadd.f32 0.0, %v554
        %556 = vdwg.mxu0
        %557 = vmatprep.subr.mxu0 %v272
        %558 = vmatpush1.msra.mxu0 %v271
        %559 = vmatprep.subr.mxu0 0.0
        %560 = vmatpush1.msra.mxu0 0.0
        %561 = vmatprep.subr.mxu0 0.0
        %562 = vmatpush1.msra.mxu0 0.0
        %563 = vmatprep.subr.mxu0 0.0
        %564 = vmatpush1.msra.mxu0 0.0
        %565 = vmatprep.subr.mxu0 0.0
        %566 = vmatpush1.msra.mxu0 0.0
        %567 = vmatprep.subr.mxu0 0.0
        %568 = vmatpush1.msra.mxu0 0.0
        %569 = vmatprep.subr.mxu0 0.0
        %570 = vmatpush1.msra.mxu0 0.0
        %571 = vmatprep.subr.mxu0 0.0
        %572 = vmatpush1.msra.mxu0 0.0
        %573 = vmatprep.subr.mxu0 0.0
        %574 = vmatpush1.msra.mxu0 0.0
        %575 = vmatprep.subr.mxu0 0.0
        %576 = vmatpush1.msra.mxu0 0.0
        %577 = vmatprep.subr.mxu0 0.0
        %578 = vmatpush1.msra.mxu0 0.0
        %579 = vmatprep.subr.mxu0 0.0
        %580 = vmatpush1.msra.mxu0 0.0
        %581 = vmatprep.subr.mxu0 0.0
        %582 = vmatpush1.msra.mxu0 0.0
        %583 = vmatprep.subr.mxu0 0.0
        %584 = vmatpush1.msra.mxu0 0.0
        %585 = vmatprep.subr.mxu0 0.0
        %586 = vmatpush1.msra.mxu0 0.0
        %587 = vmatprep.subr.mxu0 0.0
        %588 = vmatpush1.msra.mxu0 0.0
        %589 = vmatprep.subr.mxu0 0.0
        %590 = vmatpush1.msra.mxu0 0.0
        %591 = vmatprep.subr.mxu0 0.0
        %592 = vmatpush1.msra.mxu0 0.0
        %593 = vmatprep.subr.mxu0 0.0
        %594 = vmatpush1.msra.mxu0 0.0
        %595 = vmatprep.subr.mxu0 0.0
        %596 = vmatpush1.msra.mxu0 0.0
        %597 = vmatprep.subr.mxu0 0.0
        %598 = vmatpush1.msra.mxu0 0.0
        %599 = vmatprep.subr.mxu0 0.0
        %600 = vmatpush1.msra.mxu0 0.0
        %601 = vmatprep.subr.mxu0 0.0
        %602 = vmatpush1.msra.mxu0 0.0
        %603 = vmatprep.subr.mxu0 0.0
        %604 = vmatpush1.msra.mxu0 0.0
        %605 = vmatprep.subr.mxu0 0.0
        %606 = vmatpush1.msra.mxu0 0.0
        %607 = vmatprep.subr.mxu0 0.0
        %608 = vmatpush1.msra.mxu0 0.0
        %609 = vmatprep.subr.mxu0 0.0
        %610 = vmatpush1.msra.mxu0 0.0
        %611 = vmatprep.subr.mxu0 0.0
        %612 = vmatpush1.msra.mxu0 0.0
        %613 = vmatprep.subr.mxu0 0.0
        %614 = vmatpush1.msra.mxu0 0.0
        %615 = vmatprep.subr.mxu0 0.0
        %616 = vmatpush1.msra.mxu0 0.0
        %617 = vmatprep.subr.mxu0 0.0
        %618 = vmatpush1.msra.mxu0 0.0
        %619 = vmatprep.subr.mxu0 0.0
        %620 = vmatpush1.msra.mxu0 0.0
        %621 = vmatprep.mubr.f32.mxu0 0.0
        %622 = vmatmul.mubr.f32.gmra.mrb[0].mxu0 %v279
        %v623 = vpop.f32.mrb[0].mxu0
        %v624 = vadd.f32 0.0, %v623
        %v625 = vpop.f32.mrb[0].mxu0
        %v626 = vadd.f32 0.0, %v625
        %627 = vmatprep.mubr.f32.mxu0 0.0
        %628 = vmatmul.mubr.f32.gmra.mrb[0].mxu0 %v282
        %v629 = vpop.f32.mrb[0].mxu0
        %v630 = vadd.f32 0.0, %v629
        %v631 = vpop.f32.mrb[0].mxu0
        %v632 = vadd.f32 0.0, %v631
        %633 = vmatprep.mubr.f32.mxu0 0.0
        %634 = vmatmul.mubr.f32.gmra.mrb[0].mxu0 %v285
        %v635 = vpop.f32.mrb[0].mxu0
        %v636 = vadd.f32 0.0, %v635
        %v637 = vpop.f32.mrb[0].mxu0
        %v638 = vadd.f32 0.0, %v637
        %639 = vmatprep.mubr.f32.mxu0 0.0
        %640 = vmatmul.mubr.f32.gmra.mrb[0].mxu0 %v288
        %v641 = vpop.f32.mrb[0].mxu0
        %v642 = vadd.f32 0.0, %v641
        %v643 = vpop.f32.mrb[0].mxu0
        %v644 = vadd.f32 0.0, %v643
        %645 = vdwg.mxu0
        %v646 = vld [vmem:[%s1 + $0x20] sm:$0xff]
        %v647 = vld [vmem:[%s1 + $0x28] sm:$0xff]
        %v648 = vld [vmem:[%s1 + $0x30] sm:$0xff]
        %v649 = vld [vmem:[%s1 + $0x38] sm:$0xff]
        %v650 = vmax.f32 %v357, 0.0
        %v651 = vmax.f32 %v359, 0.0
        %v652 = vmax.f32 %v446, 0.0
        %v653 = vmax.f32 %v448, 0.0
        %v654 = vmax.f32 %v535, 0.0
        %v655 = vmax.f32 %v537, 0.0
        %v656 = vmax.f32 %v624, 0.0
        %v657 = vmax.f32 %v626, 0.0
        %v658 = vmax.f32 %v363, 0.0
        %v659 = vmax.f32 %v365, 0.0
        %v660 = vmax.f32 %v452, 0.0
        %v661 = vmax.f32 %v454, 0.0
        %v662 = vmax.f32 %v541, 0.0
        %v663 = vmax.f32 %v543, 0.0
        %v664 = vmax.f32 %v630, 0.0
        %v665 = vmax.f32 %v632, 0.0
        %v666 = vmax.f32 %v369, 0.0
        %v667 = vmax.f32 %v371, 0.0
        %v668 = vmax.f32 %v458, 0.0
        %v669 = vmax.f32 %v460, 0.0
        %v670 = vmax.f32 %v547, 0.0
        %v671 = vmax.f32 %v549, 0.0
        %v672 = vmax.f32 %v636, 0.0
        %v673 = vmax.f32 %v638, 0.0
        %v674 = vmax.f32 %v375, 0.0
        %v675 = vmax.f32 %v377, 0.0
        %v676 = vmax.f32 %v464, 0.0
        %v677 = vmax.f32 %v466, 0.0
        %v678 = vmax.f32 %v553, 0.0
        %v679 = vmax.f32 %v555, 0.0
        %v680 = vmax.f32 %v642, 0.0
        %v681 = vmax.f32 %v644, 0.0
        %v682 = vld [vmem:[%s2 + $0x20] sm:$0xff]
        %v683 = vld [vmem:[%s2 + $0x28] sm:$0xff]
        %v684 = vld [vmem:[%s2 + $0x30] sm:$0xff]
        %v685 = vld [vmem:[%s2 + $0x38] sm:$0xff]
        %687 = vset.pattern.permute.xlu0 0
        %688 = vperm.xlu0 %687, %v682
        %v689 = vpop.permute.xlu0 %688
        %692 = vset.pattern.permute.xlu0 0
        %693 = vperm.xlu0 %692, %v683
        %v694 = vpop.permute.xlu0 %693
        %697 = vset.pattern.permute.xlu0 0
        %698 = vperm.xlu0 %697, %v684
        %v699 = vpop.permute.xlu0 %698
        %702 = vset.pattern.permute.xlu0 0
        %703 = vperm.xlu0 %702, %v685
        %v704 = vpop.permute.xlu0 %703
        %vm706 = vcmask 261120
        %v708 = vsel %vm706, %v646, 0
        %v711 = vsel %vm706, %v647, 0
        %v714 = vsel %vm706, %v648, 0
        %v717 = vsel %vm706, %v649, 0
        %719 = vmatprep.subr.mxu0 %v651
        %720 = vmatpush1.msra.mxu0 %v650
        %721 = vmatprep.subr.mxu0 %v659
        %722 = vmatpush1.msra.mxu0 %v658
        %723 = vmatprep.subr.mxu0 %v667
        %724 = vmatpush1.msra.mxu0 %v666
        %725 = vmatprep.subr.mxu0 %v675
        %726 = vmatpush1.msra.mxu0 %v674
        %727 = vmatprep.subr.mxu0 0.0
        %728 = vmatpush1.msra.mxu0 0.0
        %729 = vmatprep.subr.mxu0 0.0
        %730 = vmatpush1.msra.mxu0 0.0
        %731 = vmatprep.subr.mxu0 0.0
        %732 = vmatpush1.msra.mxu0 0.0
        %733 = vmatprep.subr.mxu0 0.0
        %734 = vmatpush1.msra.mxu0 0.0
        %735 = vmatprep.subr.mxu0 0.0
        %736 = vmatpush1.msra.mxu0 0.0
        %737 = vmatprep.subr.mxu0 0.0
        %738 = vmatpush1.msra.mxu0 0.0
        %739 = vmatprep.subr.mxu0 0.0
        %740 = vmatpush1.msra.mxu0 0.0
        %741 = vmatprep.subr.mxu0 0.0
        %742 = vmatpush1.msra.mxu0 0.0
        %743 = vmatprep.subr.mxu0 0.0
        %744 = vmatpush1.msra.mxu0 0.0
        %745 = vmatprep.subr.mxu0 0.0
        %746 = vmatpush1.msra.mxu0 0.0
        %747 = vmatprep.subr.mxu0 0.0
        %748 = vmatpush1.msra.mxu0 0.0
        %749 = vmatprep.subr.mxu0 0.0
        %750 = vmatpush1.msra.mxu0 0.0
        %751 = vmatprep.subr.mxu0 0.0
        %752 = vmatpush1.msra.mxu0 0.0
        %753 = vmatprep.subr.mxu0 0.0
        %754 = vmatpush1.msra.mxu0 0.0
        %755 = vmatprep.subr.mxu0 0.0
        %756 = vmatpush1.msra.mxu0 0.0
        %757 = vmatprep.subr.mxu0 0.0
        %758 = vmatpush1.msra.mxu0 0.0
        %759 = vmatprep.subr.mxu0 0.0
        %760 = vmatpush1.msra.mxu0 0.0
        %761 = vmatprep.subr.mxu0 0.0
        %762 = vmatpush1.msra.mxu0 0.0
        %763 = vmatprep.subr.mxu0 0.0
        %764 = vmatpush1.msra.mxu0 0.0
        %765 = vmatprep.subr.mxu0 0.0
        %766 = vmatpush1.msra.mxu0 0.0
        %767 = vmatprep.subr.mxu0 0.0
        %768 = vmatpush1.msra.mxu0 0.0
        %769 = vmatprep.subr.mxu0 0.0
        %770 = vmatpush1.msra.mxu0 0.0
        %771 = vmatprep.subr.mxu0 0.0
        %772 = vmatpush1.msra.mxu0 0.0
        %773 = vmatprep.subr.mxu0 0.0
        %774 = vmatpush1.msra.mxu0 0.0
        %775 = vmatprep.subr.mxu0 0.0
        %776 = vmatpush1.msra.mxu0 0.0
        %777 = vmatprep.subr.mxu0 0.0
        %778 = vmatpush1.msra.mxu0 0.0
        %779 = vmatprep.subr.mxu0 0.0
        %780 = vmatpush1.msra.mxu0 0.0
        %781 = vmatprep.subr.mxu0 0.0
        %782 = vmatpush1.msra.mxu0 0.0
        %783 = vmatprep.mubr.f32.mxu0 0.0
        %784 = vmatmul.mubr.f32.gmra.mrb[0].mxu0 %v708
        %v785 = vpop.f32.mrb[0].mxu0
        %v786 = vadd.f32 %v689, %v785
        %v787 = vpop.f32.mrb[0].mxu0
        %v788 = vadd.f32 %v689, %v787
        %789 = vmatprep.mubr.f32.mxu0 0.0
        %790 = vmatmul.mubr.f32.gmra.mrb[0].mxu0 %v711
        %v791 = vpop.f32.mrb[0].mxu0
        %v792 = vadd.f32 %v694, %v791
        %v793 = vpop.f32.mrb[0].mxu0
        %v794 = vadd.f32 %v694, %v793
        %795 = vmatprep.mubr.f32.mxu0 0.0
        %796 = vmatmul.mubr.f32.gmra.mrb[0].mxu0 %v714
        %v797 = vpop.f32.mrb[0].mxu0
        %v798 = vadd.f32 %v699, %v797
        %v799 = vpop.f32.mrb[0].mxu0
        %v800 = vadd.f32 %v699, %v799
        %801 = vmatprep.mubr.f32.mxu0 0.0
        %802 = vmatmul.mubr.f32.gmra.mrb[0].mxu0 %v717
        %v803 = vpop.f32.mrb[0].mxu0
        %v804 = vadd.f32 %v704, %v803
        %v805 = vpop.f32.mrb[0].mxu0
        %v806 = vadd.f32 %v704, %v805
        %807 = vdwg.mxu0
        %808 = vmatprep.subr.mxu0 %v653
        %809 = vmatpush1.msra.mxu0 %v652
        %810 = vmatprep.subr.mxu0 %v661
        %811 = vmatpush1.msra.mxu0 %v660
        %812 = vmatprep.subr.mxu0 %v669
        %813 = vmatpush1.msra.mxu0 %v668
        %814 = vmatprep.subr.mxu0 %v677
        %815 = vmatpush1.msra.mxu0 %v676
        %816 = vmatprep.subr.mxu0 0.0
        %817 = vmatpush1.msra.mxu0 0.0
        %818 = vmatprep.subr.mxu0 0.0
        %819 = vmatpush1.msra.mxu0 0.0
        %820 = vmatprep.subr.mxu0 0.0
        %821 = vmatpush1.msra.mxu0 0.0
        %822 = vmatprep.subr.mxu0 0.0
        %823 = vmatpush1.msra.mxu0 0.0
        %824 = vmatprep.subr.mxu0 0.0
        %825 = vmatpush1.msra.mxu0 0.0
        %826 = vmatprep.subr.mxu0 0.0
        %827 = vmatpush1.msra.mxu0 0.0
        %828 = vmatprep.subr.mxu0 0.0
        %829 = vmatpush1.msra.mxu0 0.0
        %830 = vmatprep.subr.mxu0 0.0
        %831 = vmatpush1.msra.mxu0 0.0
        %832 = vmatprep.subr.mxu0 0.0
        %833 = vmatpush1.msra.mxu0 0.0
        %834 = vmatprep.subr.mxu0 0.0
        %835 = vmatpush1.msra.mxu0 0.0
        %836 = vmatprep.subr.mxu0 0.0
        %837 = vmatpush1.msra.mxu0 0.0
        %838 = vmatprep.subr.mxu0 0.0
        %839 = vmatpush1.msra.mxu0 0.0
        %840 = vmatprep.subr.mxu0 0.0
        %841 = vmatpush1.msra.mxu0 0.0
        %842 = vmatprep.subr.mxu0 0.0
        %843 = vmatpush1.msra.mxu0 0.0
        %844 = vmatprep.subr.mxu0 0.0
        %845 = vmatpush1.msra.mxu0 0.0
        %846 = vmatprep.subr.mxu0 0.0
        %847 = vmatpush1.msra.mxu0 0.0
        %848 = vmatprep.subr.mxu0 0.0
        %849 = vmatpush1.msra.mxu0 0.0
        %850 = vmatprep.subr.mxu0 0.0
        %851 = vmatpush1.msra.mxu0 0.0
        %852 = vmatprep.subr.mxu0 0.0
        %853 = vmatpush1.msra.mxu0 0.0
        %854 = vmatprep.subr.mxu0 0.0
        %855 = vmatpush1.msra.mxu0 0.0
        %856 = vmatprep.subr.mxu0 0.0
        %857 = vmatpush1.msra.mxu0 0.0
        %858 = vmatprep.subr.mxu0 0.0
        %859 = vmatpush1.msra.mxu0 0.0
        %860 = vmatprep.subr.mxu0 0.0
        %861 = vmatpush1.msra.mxu0 0.0
        %862 = vmatprep.subr.mxu0 0.0
        %863 = vmatpush1.msra.mxu0 0.0
        %864 = vmatprep.subr.mxu0 0.0
        %865 = vmatpush1.msra.mxu0 0.0
        %866 = vmatprep.subr.mxu0 0.0
        %867 = vmatpush1.msra.mxu0 0.0
        %868 = vmatprep.subr.mxu0 0.0
        %869 = vmatpush1.msra.mxu0 0.0
        %870 = vmatprep.subr.mxu0 0.0
        %871 = vmatpush1.msra.mxu0 0.0
        %872 = vmatprep.mubr.f32.mxu0 0.0
        %873 = vmatmul.mubr.f32.gmra.mrb[0].mxu0 %v708
        %v874 = vpop.f32.mrb[0].mxu0
        %v875 = vadd.f32 %v689, %v874
        %v876 = vpop.f32.mrb[0].mxu0
        %v877 = vadd.f32 %v689, %v876
        %878 = vmatprep.mubr.f32.mxu0 0.0
        %879 = vmatmul.mubr.f32.gmra.mrb[0].mxu0 %v711
        %v880 = vpop.f32.mrb[0].mxu0
        %v881 = vadd.f32 %v694, %v880
        %v882 = vpop.f32.mrb[0].mxu0
        %v883 = vadd.f32 %v694, %v882
        %884 = vmatprep.mubr.f32.mxu0 0.0
        %885 = vmatmul.mubr.f32.gmra.mrb[0].mxu0 %v714
        %v886 = vpop.f32.mrb[0].mxu0
        %v887 = vadd.f32 %v699, %v886
        %v888 = vpop.f32.mrb[0].mxu0
        %v889 = vadd.f32 %v699, %v888
        %890 = vmatprep.mubr.f32.mxu0 0.0
        %891 = vmatmul.mubr.f32.gmra.mrb[0].mxu0 %v717
        %v892 = vpop.f32.mrb[0].mxu0
        %v893 = vadd.f32 %v704, %v892
        %v894 = vpop.f32.mrb[0].mxu0
        %v895 = vadd.f32 %v704, %v894
        %896 = vdwg.mxu0
        %897 = vmatprep.subr.mxu0 %v655
        %898 = vmatpush1.msra.mxu0 %v654
        %899 = vmatprep.subr.mxu0 %v663
        %900 = vmatpush1.msra.mxu0 %v662
        %901 = vmatprep.subr.mxu0 %v671
        %902 = vmatpush1.msra.mxu0 %v670
        %903 = vmatprep.subr.mxu0 %v679
        %904 = vmatpush1.msra.mxu0 %v678
        %905 = vmatprep.subr.mxu0 0.0
        %906 = vmatpush1.msra.mxu0 0.0
        %907 = vmatprep.subr.mxu0 0.0
        %908 = vmatpush1.msra.mxu0 0.0
        %909 = vmatprep.subr.mxu0 0.0
        %910 = vmatpush1.msra.mxu0 0.0
        %911 = vmatprep.subr.mxu0 0.0
        %912 = vmatpush1.msra.mxu0 0.0
        %913 = vmatprep.subr.mxu0 0.0
        %914 = vmatpush1.msra.mxu0 0.0
        %915 = vmatprep.subr.mxu0 0.0
        %916 = vmatpush1.msra.mxu0 0.0
        %917 = vmatprep.subr.mxu0 0.0
        %918 = vmatpush1.msra.mxu0 0.0
        %919 = vmatprep.subr.mxu0 0.0
        %920 = vmatpush1.msra.mxu0 0.0
        %921 = vmatprep.subr.mxu0 0.0
        %922 = vmatpush1.msra.mxu0 0.0
        %923 = vmatprep.subr.mxu0 0.0
        %924 = vmatpush1.msra.mxu0 0.0
        %925 = vmatprep.subr.mxu0 0.0
        %926 = vmatpush1.msra.mxu0 0.0
        %927 = vmatprep.subr.mxu0 0.0
        %928 = vmatpush1.msra.mxu0 0.0
        %929 = vmatprep.subr.mxu0 0.0
        %930 = vmatpush1.msra.mxu0 0.0
        %931 = vmatprep.subr.mxu0 0.0
        %932 = vmatpush1.msra.mxu0 0.0
        %933 = vmatprep.subr.mxu0 0.0
        %934 = vmatpush1.msra.mxu0 0.0
        %935 = vmatprep.subr.mxu0 0.0
        %936 = vmatpush1.msra.mxu0 0.0
        %937 = vmatprep.subr.mxu0 0.0
        %938 = vmatpush1.msra.mxu0 0.0
        %939 = vmatprep.subr.mxu0 0.0
        %940 = vmatpush1.msra.mxu0 0.0
        %941 = vmatprep.subr.mxu0 0.0
        %942 = vmatpush1.msra.mxu0 0.0
        %943 = vmatprep.subr.mxu0 0.0
        %944 = vmatpush1.msra.mxu0 0.0
        %945 = vmatprep.subr.mxu0 0.0
        %946 = vmatpush1.msra.mxu0 0.0
        %947 = vmatprep.subr.mxu0 0.0
        %948 = vmatpush1.msra.mxu0 0.0
        %949 = vmatprep.subr.mxu0 0.0
        %950 = vmatpush1.msra.mxu0 0.0
        %951 = vmatprep.subr.mxu0 0.0
        %952 = vmatpush1.msra.mxu0 0.0
        %953 = vmatprep.subr.mxu0 0.0
        %954 = vmatpush1.msra.mxu0 0.0
        %955 = vmatprep.subr.mxu0 0.0
        %956 = vmatpush1.msra.mxu0 0.0
        %957 = vmatprep.subr.mxu0 0.0
        %958 = vmatpush1.msra.mxu0 0.0
        %959 = vmatprep.subr.mxu0 0.0
        %960 = vmatpush1.msra.mxu0 0.0
        %961 = vmatprep.mubr.f32.mxu0 0.0
        %962 = vmatmul.mubr.f32.gmra.mrb[0].mxu0 %v708
        %v963 = vpop.f32.mrb[0].mxu0
        %v964 = vadd.f32 %v689, %v963
        %v965 = vpop.f32.mrb[0].mxu0
        %v966 = vadd.f32 %v689, %v965
        %967 = vmatprep.mubr.f32.mxu0 0.0
        %968 = vmatmul.mubr.f32.gmra.mrb[0].mxu0 %v711
        %v969 = vpop.f32.mrb[0].mxu0
        %v970 = vadd.f32 %v694, %v969
        %v971 = vpop.f32.mrb[0].mxu0
        %v972 = vadd.f32 %v694, %v971
        %973 = vmatprep.mubr.f32.mxu0 0.0
        %974 = vmatmul.mubr.f32.gmra.mrb[0].mxu0 %v714
        %v975 = vpop.f32.mrb[0].mxu0
        %v976 = vadd.f32 %v699, %v975
        %v977 = vpop.f32.mrb[0].mxu0
        %v978 = vadd.f32 %v699, %v977
        %979 = vmatprep.mubr.f32.mxu0 0.0
        %980 = vmatmul.mubr.f32.gmra.mrb[0].mxu0 %v717
        %v981 = vpop.f32.mrb[0].mxu0
        %v982 = vadd.f32 %v704, %v981
        %v983 = vpop.f32.mrb[0].mxu0
        %v984 = vadd.f32 %v704, %v983
        %985 = vdwg.mxu0
        %986 = vmatprep.subr.mxu0 %v657
        %987 = vmatpush1.msra.mxu0 %v656
        %988 = vmatprep.subr.mxu0 %v665
        %989 = vmatpush1.msra.mxu0 %v664
        %990 = vmatprep.subr.mxu0 %v673
        %991 = vmatpush1.msra.mxu0 %v672
        %992 = vmatprep.subr.mxu0 %v681
        %993 = vmatpush1.msra.mxu0 %v680
        %994 = vmatprep.subr.mxu0 0.0
        %995 = vmatpush1.msra.mxu0 0.0
        %996 = vmatprep.subr.mxu0 0.0
        %997 = vmatpush1.msra.mxu0 0.0
        %998 = vmatprep.subr.mxu0 0.0
        %999 = vmatpush1.msra.mxu0 0.0
        %1000 = vmatprep.subr.mxu0 0.0
        %1001 = vmatpush1.msra.mxu0 0.0
        %1002 = vmatprep.subr.mxu0 0.0
        %1003 = vmatpush1.msra.mxu0 0.0
        %1004 = vmatprep.subr.mxu0 0.0
        %1005 = vmatpush1.msra.mxu0 0.0
        %1006 = vmatprep.subr.mxu0 0.0
        %1007 = vmatpush1.msra.mxu0 0.0
        %1008 = vmatprep.subr.mxu0 0.0
        %1009 = vmatpush1.msra.mxu0 0.0
        %1010 = vmatprep.subr.mxu0 0.0
        %1011 = vmatpush1.msra.mxu0 0.0
        %1012 = vmatprep.subr.mxu0 0.0
        %1013 = vmatpush1.msra.mxu0 0.0
        %1014 = vmatprep.subr.mxu0 0.0
        %1015 = vmatpush1.msra.mxu0 0.0
        %1016 = vmatprep.subr.mxu0 0.0
        %1017 = vmatpush1.msra.mxu0 0.0
        %1018 = vmatprep.subr.mxu0 0.0
        %1019 = vmatpush1.msra.mxu0 0.0
        %1020 = vmatprep.subr.mxu0 0.0
        %1021 = vmatpush1.msra.mxu0 0.0
        %1022 = vmatprep.subr.mxu0 0.0
        %1023 = vmatpush1.msra.mxu0 0.0
        %1024 = vmatprep.subr.mxu0 0.0
        %1025 = vmatpush1.msra.mxu0 0.0
        %1026 = vmatprep.subr.mxu0 0.0
        %1027 = vmatpush1.msra.mxu0 0.0
        %1028 = vmatprep.subr.mxu0 0.0
        %1029 = vmatpush1.msra.mxu0 0.0
        %1030 = vmatprep.subr.mxu0 0.0
        %1031 = vmatpush1.msra.mxu0 0.0
        %1032 = vmatprep.subr.mxu0 0.0
        %1033 = vmatpush1.msra.mxu0 0.0
        %1034 = vmatprep.subr.mxu0 0.0
        %1035 = vmatpush1.msra.mxu0 0.0
        %1036 = vmatprep.subr.mxu0 0.0
        %1037 = vmatpush1.msra.mxu0 0.0
        %1038 = vmatprep.subr.mxu0 0.0
        %1039 = vmatpush1.msra.mxu0 0.0
        %1040 = vmatprep.subr.mxu0 0.0
        %1041 = vmatpush1.msra.mxu0 0.0
        %1042 = vmatprep.subr.mxu0 0.0
        %1043 = vmatpush1.msra.mxu0 0.0
        %1044 = vmatprep.subr.mxu0 0.0
        %1045 = vmatpush1.msra.mxu0 0.0
        %1046 = vmatprep.subr.mxu0 0.0
        %1047 = vmatpush1.msra.mxu0 0.0
        %1048 = vmatprep.subr.mxu0 0.0
        %1049 = vmatpush1.msra.mxu0 0.0
        %1050 = vmatprep.mubr.f32.mxu0 0.0
        %1051 = vmatmul.mubr.f32.gmra.mrb[0].mxu0 %v708
        %v1052 = vpop.f32.mrb[0].mxu0
        %v1053 = vadd.f32 %v689, %v1052
        %v1054 = vpop.f32.mrb[0].mxu0
        %v1055 = vadd.f32 %v689, %v1054
        %1056 = vmatprep.mubr.f32.mxu0 0.0
        %1057 = vmatmul.mubr.f32.gmra.mrb[0].mxu0 %v711
        %v1058 = vpop.f32.mrb[0].mxu0
        %v1059 = vadd.f32 %v694, %v1058
        %v1060 = vpop.f32.mrb[0].mxu0
        %v1061 = vadd.f32 %v694, %v1060
        %1062 = vmatprep.mubr.f32.mxu0 0.0
        %1063 = vmatmul.mubr.f32.gmra.mrb[0].mxu0 %v714
        %v1064 = vpop.f32.mrb[0].mxu0
        %v1065 = vadd.f32 %v699, %v1064
        %v1066 = vpop.f32.mrb[0].mxu0
        %v1067 = vadd.f32 %v699, %v1066
        %1068 = vmatprep.mubr.f32.mxu0 0.0
        %1069 = vmatmul.mubr.f32.gmra.mrb[0].mxu0 %v717
        %v1070 = vpop.f32.mrb[0].mxu0
        %v1071 = vadd.f32 %v704, %v1070
        %v1072 = vpop.f32.mrb[0].mxu0
        %v1073 = vadd.f32 %v704, %v1072
        %1074 = vdwg.mxu0
        %v1075 = vmax.f32 %v786, 0.0
        %v1076 = vmax.f32 %v788, 0.0
        %v1077 = vmax.f32 %v875, 0.0
        %v1078 = vmax.f32 %v877, 0.0
        %v1079 = vmax.f32 %v964, 0.0
        %v1080 = vmax.f32 %v966, 0.0
        %v1081 = vmax.f32 %v1053, 0.0
        %v1082 = vmax.f32 %v1055, 0.0
        %v1083 = vmax.f32 %v792, 0.0
        %v1084 = vmax.f32 %v794, 0.0
        %v1085 = vmax.f32 %v881, 0.0
        %v1086 = vmax.f32 %v883, 0.0
        %v1087 = vmax.f32 %v970, 0.0
        %v1088 = vmax.f32 %v972, 0.0
        %v1089 = vmax.f32 %v1059, 0.0
        %v1090 = vmax.f32 %v1061, 0.0
        %v1091 = vmax.f32 %v798, 0.0
        %v1092 = vmax.f32 %v800, 0.0
        %v1093 = vmax.f32 %v887, 0.0
        %v1094 = vmax.f32 %v889, 0.0
        %v1095 = vmax.f32 %v976, 0.0
        %v1096 = vmax.f32 %v978, 0.0
        %v1097 = vmax.f32 %v1065, 0.0
        %v1098 = vmax.f32 %v1067, 0.0
        %v1099 = vmax.f32 %v804, 0.0
        %v1100 = vmax.f32 %v806, 0.0
        %v1101 = vmax.f32 %v893, 0.0
        %v1102 = vmax.f32 %v895, 0.0
        %v1103 = vmax.f32 %v982, 0.0
        %v1104 = vmax.f32 %v984, 0.0
        %v1105 = vmax.f32 %v1071, 0.0
        %v1106 = vmax.f32 %v1073, 0.0
        %v1107 = vld [vmem:[%s1 + $0x40] sm:$0xff]
        %v1108 = vld [vmem:[%s1 + $0x48] sm:$0xff]
        %v1109 = vld [vmem:[%s1 + $0x50] sm:$0xff]
        %v1110 = vld [vmem:[%s1 + $0x58] sm:$0xff]
        %v1111 = vld [vmem:[%s1 + $0x60] sm:$0xff]
        %v1112 = vld [vmem:[%s1 + $0x68] sm:$0xff]
        %v1113 = vld [vmem:[%s1 + $0x70] sm:$0xff]
        %v1114 = vld [vmem:[%s1 + $0x78] sm:$0xff]
        %v1115 = vld [vmem:[%s1 + $0x80] sm:$0xff]
        %v1116 = vld [vmem:[%s1 + $0x88] sm:$0xff]
        %v1117 = vld [vmem:[%s1 + $0x90] sm:$0xff]
        %v1118 = vld [vmem:[%s1 + $0x98] sm:$0xff]
        %v1119 = vld [vmem:[%s1 + $0xa0] sm:$0xff]
        %v1120 = vld [vmem:[%s1 + $0xa8] sm:$0xff]
        %v1121 = vld [vmem:[%s1 + $0xb0] sm:$0xff]
        %v1122 = vld [vmem:[%s1 + $0xb8] sm:$0xff]
        %v1123 = vld [vmem:[%s2 + $0x40] sm:$0xff]
        %v1124 = vld [vmem:[%s2 + $0x48] sm:$0xff]
        %v1125 = vld [vmem:[%s2 + $0x50] sm:$0xff]
        %v1126 = vld [vmem:[%s2 + $0x58] sm:$0xff]
        %v1127 = vld [vmem:[%s2 + $0x60] sm:$0xff]
        %v1128 = vld [vmem:[%s2 + $0x68] sm:$0xff]
        %v1129 = vld [vmem:[%s2 + $0x70] sm:$0xff]
        %v1130 = vld [vmem:[%s2 + $0x78] sm:$0xff]
        %v1131 = vld [vmem:[%s2 + $0x80] sm:$0xff]
        %v1132 = vld [vmem:[%s2 + $0x88] sm:$0xff]
        %v1133 = vld [vmem:[%s2 + $0x90] sm:$0xff]
        %v1134 = vld [vmem:[%s2 + $0x98] sm:$0xff]
        %v1135 = vld [vmem:[%s2 + $0xa0] sm:$0xff]
        %v1136 = vld [vmem:[%s2 + $0xa8] sm:$0xff]
        %v1137 = vld [vmem:[%s2 + $0xb0] sm:$0xff]
        %v1138 = vld [vmem:[%s2 + $0xb8] sm:$0xff]
        %1140 = vset.pattern.permute.xlu0 0
        %1141 = vperm.xlu0 %1140, %v1123
        %v1142 = vpop.permute.xlu0 %1141
        %1145 = vset.pattern.permute.xlu0 0
        %1146 = vperm.xlu0 %1145, %v1124
        %v1147 = vpop.permute.xlu0 %1146
        %1150 = vset.pattern.permute.xlu0 0
        %1151 = vperm.xlu0 %1150, %v1125
        %v1152 = vpop.permute.xlu0 %1151
        %1155 = vset.pattern.permute.xlu0 0
        %1156 = vperm.xlu0 %1155, %v1126
        %v1157 = vpop.permute.xlu0 %1156
        %1160 = vset.pattern.permute.xlu0 0
        %1161 = vperm.xlu0 %1160, %v1127
        %v1162 = vpop.permute.xlu0 %1161
        %1165 = vset.pattern.permute.xlu0 0
        %1166 = vperm.xlu0 %1165, %v1128
        %v1167 = vpop.permute.xlu0 %1166
        %1170 = vset.pattern.permute.xlu0 0
        %1171 = vperm.xlu0 %1170, %v1129
        %v1172 = vpop.permute.xlu0 %1171
        %1175 = vset.pattern.permute.xlu0 0
        %1176 = vperm.xlu0 %1175, %v1130
        %v1177 = vpop.permute.xlu0 %1176
        %1180 = vset.pattern.permute.xlu0 0
        %1181 = vperm.xlu0 %1180, %v1131
        %v1182 = vpop.permute.xlu0 %1181
        %1185 = vset.pattern.permute.xlu0 0
        %1186 = vperm.xlu0 %1185, %v1132
        %v1187 = vpop.permute.xlu0 %1186
        %1190 = vset.pattern.permute.xlu0 0
        %1191 = vperm.xlu0 %1190, %v1133
        %v1192 = vpop.permute.xlu0 %1191
        %1195 = vset.pattern.permute.xlu0 0
        %1196 = vperm.xlu0 %1195, %v1134
        %v1197 = vpop.permute.xlu0 %1196
        %1200 = vset.pattern.permute.xlu0 0
        %1201 = vperm.xlu0 %1200, %v1135
        %v1202 = vpop.permute.xlu0 %1201
        %1205 = vset.pattern.permute.xlu0 0
        %1206 = vperm.xlu0 %1205, %v1136
        %v1207 = vpop.permute.xlu0 %1206
        %1210 = vset.pattern.permute.xlu0 0
        %1211 = vperm.xlu0 %1210, %v1137
        %v1212 = vpop.permute.xlu0 %1211
        %1215 = vset.pattern.permute.xlu0 0
        %1216 = vperm.xlu0 %1215, %v1138
        %v1217 = vpop.permute.xlu0 %1216
        %v1220 = vsel %vm706, %v1107, 0
        %v1223 = vsel %vm706, %v1108, 0
        %v1226 = vsel %vm706, %v1109, 0
        %v1229 = vsel %vm706, %v1110, 0
        %v1232 = vsel %vm706, %v1111, 0
        %v1235 = vsel %vm706, %v1112, 0
        %v1238 = vsel %vm706, %v1113, 0
        %v1241 = vsel %vm706, %v1114, 0
        %v1244 = vsel %vm706, %v1115, 0
        %v1247 = vsel %vm706, %v1116, 0
        %v1250 = vsel %vm706, %v1117, 0
        %v1253 = vsel %vm706, %v1118, 0
        %v1256 = vsel %vm706, %v1119, 0
        %v1259 = vsel %vm706, %v1120, 0
        %v1262 = vsel %vm706, %v1121, 0
        %v1265 = vsel %vm706, %v1122, 0
        %1267 = vmatprep.subr.mxu0 %v1076
        %1268 = vmatpush1.msra.mxu0 %v1075
        %1269 = vmatprep.subr.mxu0 %v1084
        %1270 = vmatpush1.msra.mxu0 %v1083
        %1271 = vmatprep.subr.mxu0 %v1092
        %1272 = vmatpush1.msra.mxu0 %v1091
        %1273 = vmatprep.subr.mxu0 %v1100
        %1274 = vmatpush1.msra.mxu0 %v1099
        %1275 = vmatprep.subr.mxu0 0.0
        %1276 = vmatpush1.msra.mxu0 0.0
        %1277 = vmatprep.subr.mxu0 0.0
        %1278 = vmatpush1.msra.mxu0 0.0
        %1279 = vmatprep.subr.mxu0 0.0
        %1280 = vmatpush1.msra.mxu0 0.0
        %1281 = vmatprep.subr.mxu0 0.0
        %1282 = vmatpush1.msra.mxu0 0.0
        %1283 = vmatprep.subr.mxu0 0.0
        %1284 = vmatpush1.msra.mxu0 0.0
        %1285 = vmatprep.subr.mxu0 0.0
        %1286 = vmatpush1.msra.mxu0 0.0
        %1287 = vmatprep.subr.mxu0 0.0
        %1288 = vmatpush1.msra.mxu0 0.0
        %1289 = vmatprep.subr.mxu0 0.0
        %1290 = vmatpush1.msra.mxu0 0.0
        %1291 = vmatprep.subr.mxu0 0.0
        %1292 = vmatpush1.msra.mxu0 0.0
        %1293 = vmatprep.subr.mxu0 0.0
        %1294 = vmatpush1.msra.mxu0 0.0
        %1295 = vmatprep.subr.mxu0 0.0
        %1296 = vmatpush1.msra.mxu0 0.0
        %1297 = vmatprep.subr.mxu0 0.0
        %1298 = vmatpush1.msra.mxu0 0.0
        %1299 = vmatprep.subr.mxu0 0.0
        %1300 = vmatpush1.msra.mxu0 0.0
        %1301 = vmatprep.subr.mxu0 0.0
        %1302 = vmatpush1.msra.mxu0 0.0
        %1303 = vmatprep.subr.mxu0 0.0
        %1304 = vmatpush1.msra.mxu0 0.0
        %1305 = vmatprep.subr.mxu0 0.0
        %1306 = vmatpush1.msra.mxu0 0.0
        %1307 = vmatprep.subr.mxu0 0.0
        %1308 = vmatpush1.msra.mxu0 0.0
        %1309 = vmatprep.subr.mxu0 0.0
        %1310 = vmatpush1.msra.mxu0 0.0
        %1311 = vmatprep.subr.mxu0 0.0
        %1312 = vmatpush1.msra.mxu0 0.0
        %1313 = vmatprep.subr.mxu0 0.0
        %1314 = vmatpush1.msra.mxu0 0.0
        %1315 = vmatprep.subr.mxu0 0.0
        %1316 = vmatpush1.msra.mxu0 0.0
        %1317 = vmatprep.subr.mxu0 0.0
        %1318 = vmatpush1.msra.mxu0 0.0
        %1319 = vmatprep.subr.mxu0 0.0
        %1320 = vmatpush1.msra.mxu0 0.0
        %1321 = vmatprep.subr.mxu0 0.0
        %1322 = vmatpush1.msra.mxu0 0.0
        %1323 = vmatprep.subr.mxu0 0.0
        %1324 = vmatpush1.msra.mxu0 0.0
        %1325 = vmatprep.subr.mxu0 0.0
        %1326 = vmatpush1.msra.mxu0 0.0
        %1327 = vmatprep.subr.mxu0 0.0
        %1328 = vmatpush1.msra.mxu0 0.0
        %1329 = vmatprep.subr.mxu0 0.0
        %1330 = vmatpush1.msra.mxu0 0.0
        %1331 = vmatprep.mubr.f32.mxu0 0.0
        %1332 = vmatmul.mubr.f32.gmra.mrb[0].mxu0 %v1220
        %v1333 = vpop.f32.mrb[0].mxu0
        %v1334 = vadd.f32 %v1142, %v1333
        %v1335 = vpop.f32.mrb[0].mxu0
        %v1336 = vadd.f32 %v1142, %v1335
        %1337 = vmatprep.mubr.f32.mxu0 0.0
        %1338 = vmatmul.mubr.f32.gmra.mrb[0].mxu0 %v1223
        %v1339 = vpop.f32.mrb[0].mxu0
        %v1340 = vadd.f32 %v1147, %v1339
        %v1341 = vpop.f32.mrb[0].mxu0
        %v1342 = vadd.f32 %v1147, %v1341
        %1343 = vmatprep.mubr.f32.mxu0 0.0
        %1344 = vmatmul.mubr.f32.gmra.mrb[0].mxu0 %v1226
        %v1345 = vpop.f32.mrb[0].mxu0
        %v1346 = vadd.f32 %v1152, %v1345
        %v1347 = vpop.f32.mrb[0].mxu0
        %v1348 = vadd.f32 %v1152, %v1347
        %1349 = vmatprep.mubr.f32.mxu0 0.0
        %1350 = vmatmul.mubr.f32.gmra.mrb[0].mxu0 %v1229
        %v1351 = vpop.f32.mrb[0].mxu0
        %v1352 = vadd.f32 %v1157, %v1351
        %v1353 = vpop.f32.mrb[0].mxu0
        %v1354 = vadd.f32 %v1157, %v1353
        %1355 = vmatprep.mubr.f32.mxu0 0.0
        %1356 = vmatmul.mubr.f32.gmra.mrb[0].mxu0 %v1232
        %v1357 = vpop.f32.mrb[0].mxu0
        %v1358 = vadd.f32 %v1162, %v1357
        %v1359 = vpop.f32.mrb[0].mxu0
        %v1360 = vadd.f32 %v1162, %v1359
        %1361 = vmatprep.mubr.f32.mxu0 0.0
        %1362 = vmatmul.mubr.f32.gmra.mrb[0].mxu0 %v1235
        %v1363 = vpop.f32.mrb[0].mxu0
        %v1364 = vadd.f32 %v1167, %v1363
        %v1365 = vpop.f32.mrb[0].mxu0
        %v1366 = vadd.f32 %v1167, %v1365
        %1367 = vmatprep.mubr.f32.mxu0 0.0
        %1368 = vmatmul.mubr.f32.gmra.mrb[0].mxu0 %v1238
        %v1369 = vpop.f32.mrb[0].mxu0
        %v1370 = vadd.f32 %v1172, %v1369
        %v1371 = vpop.f32.mrb[0].mxu0
        %v1372 = vadd.f32 %v1172, %v1371
        %1373 = vmatprep.mubr.f32.mxu0 0.0
        %1374 = vmatmul.mubr.f32.gmra.mrb[0].mxu0 %v1241
        %v1375 = vpop.f32.mrb[0].mxu0
        %v1376 = vadd.f32 %v1177, %v1375
        %v1377 = vpop.f32.mrb[0].mxu0
        %v1378 = vadd.f32 %v1177, %v1377
        %1379 = vmatprep.mubr.f32.mxu0 0.0
        %1380 = vmatmul.mubr.f32.gmra.mrb[0].mxu0 %v1244
        %v1381 = vpop.f32.mrb[0].mxu0
        %v1382 = vadd.f32 %v1182, %v1381
        %v1383 = vpop.f32.mrb[0].mxu0
        %v1384 = vadd.f32 %v1182, %v1383
        %1385 = vmatprep.mubr.f32.mxu0 0.0
        %1386 = vmatmul.mubr.f32.gmra.mrb[0].mxu0 %v1247
        %v1387 = vpop.f32.mrb[0].mxu0
        %v1388 = vadd.f32 %v1187, %v1387
        %v1389 = vpop.f32.mrb[0].mxu0
        %v1390 = vadd.f32 %v1187, %v1389
        %1391 = vmatprep.mubr.f32.mxu0 0.0
        %1392 = vmatmul.mubr.f32.gmra.mrb[0].mxu0 %v1250
        %v1393 = vpop.f32.mrb[0].mxu0
        %v1394 = vadd.f32 %v1192, %v1393
        %v1395 = vpop.f32.mrb[0].mxu0
        %v1396 = vadd.f32 %v1192, %v1395
        %1397 = vmatprep.mubr.f32.mxu0 0.0
        %1398 = vmatmul.mubr.f32.gmra.mrb[0].mxu0 %v1253
        %v1399 = vpop.f32.mrb[0].mxu0
        %v1400 = vadd.f32 %v1197, %v1399
        %v1401 = vpop.f32.mrb[0].mxu0
        %v1402 = vadd.f32 %v1197, %v1401
        %1403 = vmatprep.mubr.f32.mxu0 0.0
        %1404 = vmatmul.mubr.f32.gmra.mrb[0].mxu0 %v1256
        %v1405 = vpop.f32.mrb[0].mxu0
        %v1406 = vadd.f32 %v1202, %v1405
        %v1407 = vpop.f32.mrb[0].mxu0
        %v1408 = vadd.f32 %v1202, %v1407
        %1409 = vmatprep.mubr.f32.mxu0 0.0
        %1410 = vmatmul.mubr.f32.gmra.mrb[0].mxu0 %v1259
        %v1411 = vpop.f32.mrb[0].mxu0
        %v1412 = vadd.f32 %v1207, %v1411
        %v1413 = vpop.f32.mrb[0].mxu0
        %v1414 = vadd.f32 %v1207, %v1413
        %1415 = vmatprep.mubr.f32.mxu0 0.0
        %1416 = vmatmul.mubr.f32.gmra.mrb[0].mxu0 %v1262
        %v1417 = vpop.f32.mrb[0].mxu0
        %v1418 = vadd.f32 %v1212, %v1417
        %v1419 = vpop.f32.mrb[0].mxu0
        %v1420 = vadd.f32 %v1212, %v1419
        %1421 = vmatprep.mubr.f32.mxu0 0.0
        %1422 = vmatmul.mubr.f32.gmra.mrb[0].mxu0 %v1265
        %v1423 = vpop.f32.mrb[0].mxu0
        %v1424 = vadd.f32 %v1217, %v1423
        %v1425 = vpop.f32.mrb[0].mxu0
        %v1426 = vadd.f32 %v1217, %v1425
        %1427 = vdwg.mxu0
        %1428 = vmatprep.subr.mxu0 %v1078
        %1429 = vmatpush1.msra.mxu0 %v1077
        %1430 = vmatprep.subr.mxu0 %v1086
        %1431 = vmatpush1.msra.mxu0 %v1085
        %1432 = vmatprep.subr.mxu0 %v1094
        %1433 = vmatpush1.msra.mxu0 %v1093
        %1434 = vmatprep.subr.mxu0 %v1102
        %1435 = vmatpush1.msra.mxu0 %v1101
        %1436 = vmatprep.subr.mxu0 0.0
        %1437 = vmatpush1.msra.mxu0 0.0
        %1438 = vmatprep.subr.mxu0 0.0
        %1439 = vmatpush1.msra.mxu0 0.0
        %1440 = vmatprep.subr.mxu0 0.0
        %1441 = vmatpush1.msra.mxu0 0.0
        %1442 = vmatprep.subr.mxu0 0.0
        %1443 = vmatpush1.msra.mxu0 0.0
        %1444 = vmatprep.subr.mxu0 0.0
        %1445 = vmatpush1.msra.mxu0 0.0
        %1446 = vmatprep.subr.mxu0 0.0
        %1447 = vmatpush1.msra.mxu0 0.0
        %1448 = vmatprep.subr.mxu0 0.0
        %1449 = vmatpush1.msra.mxu0 0.0
        %1450 = vmatprep.subr.mxu0 0.0
        %1451 = vmatpush1.msra.mxu0 0.0
        %1452 = vmatprep.subr.mxu0 0.0
        %1453 = vmatpush1.msra.mxu0 0.0
        %1454 = vmatprep.subr.mxu0 0.0
        %1455 = vmatpush1.msra.mxu0 0.0
        %1456 = vmatprep.subr.mxu0 0.0
        %1457 = vmatpush1.msra.mxu0 0.0
        %1458 = vmatprep.subr.mxu0 0.0
        %1459 = vmatpush1.msra.mxu0 0.0
        %1460 = vmatprep.subr.mxu0 0.0
        %1461 = vmatpush1.msra.mxu0 0.0
        %1462 = vmatprep.subr.mxu0 0.0
        %1463 = vmatpush1.msra.mxu0 0.0
        %1464 = vmatprep.subr.mxu0 0.0
        %1465 = vmatpush1.msra.mxu0 0.0
        %1466 = vmatprep.subr.mxu0 0.0
        %1467 = vmatpush1.msra.mxu0 0.0
        %1468 = vmatprep.subr.mxu0 0.0
        %1469 = vmatpush1.msra.mxu0 0.0
        %1470 = vmatprep.subr.mxu0 0.0
        %1471 = vmatpush1.msra.mxu0 0.0
        %1472 = vmatprep.subr.mxu0 0.0
        %1473 = vmatpush1.msra.mxu0 0.0
        %1474 = vmatprep.subr.mxu0 0.0
        %1475 = vmatpush1.msra.mxu0 0.0
        %1476 = vmatprep.subr.mxu0 0.0
        %1477 = vmatpush1.msra.mxu0 0.0
        %1478 = vmatprep.subr.mxu0 0.0
        %1479 = vmatpush1.msra.mxu0 0.0
        %1480 = vmatprep.subr.mxu0 0.0
        %1481 = vmatpush1.msra.mxu0 0.0
        %1482 = vmatprep.subr.mxu0 0.0
        %1483 = vmatpush1.msra.mxu0 0.0
        %1484 = vmatprep.subr.mxu0 0.0
        %1485 = vmatpush1.msra.mxu0 0.0
        %1486 = vmatprep.subr.mxu0 0.0
        %1487 = vmatpush1.msra.mxu0 0.0
        %1488 = vmatprep.subr.mxu0 0.0
        %1489 = vmatpush1.msra.mxu0 0.0
        %1490 = vmatprep.subr.mxu0 0.0
        %1491 = vmatpush1.msra.mxu0 0.0
        %1492 = vmatprep.mubr.f32.mxu0 0.0
        %1493 = vmatmul.mubr.f32.gmra.mrb[0].mxu0 %v1220
        %v1494 = vpop.f32.mrb[0].mxu0
        %v1495 = vadd.f32 %v1142, %v1494
        %v1496 = vpop.f32.mrb[0].mxu0
        %v1497 = vadd.f32 %v1142, %v1496
        %1498 = vmatprep.mubr.f32.mxu0 0.0
        %1499 = vmatmul.mubr.f32.gmra.mrb[0].mxu0 %v1223
        %v1500 = vpop.f32.mrb[0].mxu0
        %v1501 = vadd.f32 %v1147, %v1500
        %v1502 = vpop.f32.mrb[0].mxu0
        %v1503 = vadd.f32 %v1147, %v1502
        %1504 = vmatprep.mubr.f32.mxu0 0.0
        %1505 = vmatmul.mubr.f32.gmra.mrb[0].mxu0 %v1226
        %v1506 = vpop.f32.mrb[0].mxu0
        %v1507 = vadd.f32 %v1152, %v1506
        %v1508 = vpop.f32.mrb[0].mxu0
        %v1509 = vadd.f32 %v1152, %v1508
        %1510 = vmatprep.mubr.f32.mxu0 0.0
        %1511 = vmatmul.mubr.f32.gmra.mrb[0].mxu0 %v1229
        %v1512 = vpop.f32.mrb[0].mxu0
        %v1513 = vadd.f32 %v1157, %v1512
        %v1514 = vpop.f32.mrb[0].mxu0
        %v1515 = vadd.f32 %v1157, %v1514
        %1516 = vmatprep.mubr.f32.mxu0 0.0
        %1517 = vmatmul.mubr.f32.gmra.mrb[0].mxu0 %v1232
        %v1518 = vpop.f32.mrb[0].mxu0
        %v1519 = vadd.f32 %v1162, %v1518
        %v1520 = vpop.f32.mrb[0].mxu0
        %v1521 = vadd.f32 %v1162, %v1520
        %1522 = vmatprep.mubr.f32.mxu0 0.0
        %1523 = vmatmul.mubr.f32.gmra.mrb[0].mxu0 %v1235
        %v1524 = vpop.f32.mrb[0].mxu0
        %v1525 = vadd.f32 %v1167, %v1524
        %v1526 = vpop.f32.mrb[0].mxu0
        %v1527 = vadd.f32 %v1167, %v1526
        %1528 = vmatprep.mubr.f32.mxu0 0.0
        %1529 = vmatmul.mubr.f32.gmra.mrb[0].mxu0 %v1238
        %v1530 = vpop.f32.mrb[0].mxu0
        %v1531 = vadd.f32 %v1172, %v1530
        %v1532 = vpop.f32.mrb[0].mxu0
        %v1533 = vadd.f32 %v1172, %v1532
        %1534 = vmatprep.mubr.f32.mxu0 0.0
        %1535 = vmatmul.mubr.f32.gmra.mrb[0].mxu0 %v1241
        %v1536 = vpop.f32.mrb[0].mxu0
        %v1537 = vadd.f32 %v1177, %v1536
        %v1538 = vpop.f32.mrb[0].mxu0
        %v1539 = vadd.f32 %v1177, %v1538
        %1540 = vmatprep.mubr.f32.mxu0 0.0
        %1541 = vmatmul.mubr.f32.gmra.mrb[0].mxu0 %v1244
        %v1542 = vpop.f32.mrb[0].mxu0
        %v1543 = vadd.f32 %v1182, %v1542
        %v1544 = vpop.f32.mrb[0].mxu0
        %v1545 = vadd.f32 %v1182, %v1544
        %1546 = vmatprep.mubr.f32.mxu0 0.0
        %1547 = vmatmul.mubr.f32.gmra.mrb[0].mxu0 %v1247
        %v1548 = vpop.f32.mrb[0].mxu0
        %v1549 = vadd.f32 %v1187, %v1548
        %v1550 = vpop.f32.mrb[0].mxu0
        %v1551 = vadd.f32 %v1187, %v1550
        %1552 = vmatprep.mubr.f32.mxu0 0.0
        %1553 = vmatmul.mubr.f32.gmra.mrb[0].mxu0 %v1250
        %v1554 = vpop.f32.mrb[0].mxu0
        %v1555 = vadd.f32 %v1192, %v1554
        %v1556 = vpop.f32.mrb[0].mxu0
        %v1557 = vadd.f32 %v1192, %v1556
        %1558 = vmatprep.mubr.f32.mxu0 0.0
        %1559 = vmatmul.mubr.f32.gmra.mrb[0].mxu0 %v1253
        %v1560 = vpop.f32.mrb[0].mxu0
        %v1561 = vadd.f32 %v1197, %v1560
        %v1562 = vpop.f32.mrb[0].mxu0
        %v1563 = vadd.f32 %v1197, %v1562
        %1564 = vmatprep.mubr.f32.mxu0 0.0
        %1565 = vmatmul.mubr.f32.gmra.mrb[0].mxu0 %v1256
        %v1566 = vpop.f32.mrb[0].mxu0
        %v1567 = vadd.f32 %v1202, %v1566
        %v1568 = vpop.f32.mrb[0].mxu0
        %v1569 = vadd.f32 %v1202, %v1568
        %1570 = vmatprep.mubr.f32.mxu0 0.0
        %1571 = vmatmul.mubr.f32.gmra.mrb[0].mxu0 %v1259
        %v1572 = vpop.f32.mrb[0].mxu0
        %v1573 = vadd.f32 %v1207, %v1572
        %v1574 = vpop.f32.mrb[0].mxu0
        %v1575 = vadd.f32 %v1207, %v1574
        %1576 = vmatprep.mubr.f32.mxu0 0.0
        %1577 = vmatmul.mubr.f32.gmra.mrb[0].mxu0 %v1262
        %v1578 = vpop.f32.mrb[0].mxu0
        %v1579 = vadd.f32 %v1212, %v1578
        %v1580 = vpop.f32.mrb[0].mxu0
        %v1581 = vadd.f32 %v1212, %v1580
        %1582 = vmatprep.mubr.f32.mxu0 0.0
        %1583 = vmatmul.mubr.f32.gmra.mrb[0].mxu0 %v1265
        %v1584 = vpop.f32.mrb[0].mxu0
        %v1585 = vadd.f32 %v1217, %v1584
        %v1586 = vpop.f32.mrb[0].mxu0
        %v1587 = vadd.f32 %v1217, %v1586
        %1588 = vdwg.mxu0
        %1589 = vmatprep.subr.mxu0 %v1080
        %1590 = vmatpush1.msra.mxu0 %v1079
        %1591 = vmatprep.subr.mxu0 %v1088
        %1592 = vmatpush1.msra.mxu0 %v1087
        %1593 = vmatprep.subr.mxu0 %v1096
        %1594 = vmatpush1.msra.mxu0 %v1095
        %1595 = vmatprep.subr.mxu0 %v1104
        %1596 = vmatpush1.msra.mxu0 %v1103
        %1597 = vmatprep.subr.mxu0 0.0
        %1598 = vmatpush1.msra.mxu0 0.0
        %1599 = vmatprep.subr.mxu0 0.0
        %1600 = vmatpush1.msra.mxu0 0.0
        %1601 = vmatprep.subr.mxu0 0.0
        %1602 = vmatpush1.msra.mxu0 0.0
        %1603 = vmatprep.subr.mxu0 0.0
        %1604 = vmatpush1.msra.mxu0 0.0
        %1605 = vmatprep.subr.mxu0 0.0
        %1606 = vmatpush1.msra.mxu0 0.0
        %1607 = vmatprep.subr.mxu0 0.0
        %1608 = vmatpush1.msra.mxu0 0.0
        %1609 = vmatprep.subr.mxu0 0.0
        %1610 = vmatpush1.msra.mxu0 0.0
        %1611 = vmatprep.subr.mxu0 0.0
        %1612 = vmatpush1.msra.mxu0 0.0
        %1613 = vmatprep.subr.mxu0 0.0
        %1614 = vmatpush1.msra.mxu0 0.0
        %1615 = vmatprep.subr.mxu0 0.0
        %1616 = vmatpush1.msra.mxu0 0.0
        %1617 = vmatprep.subr.mxu0 0.0
        %1618 = vmatpush1.msra.mxu0 0.0
        %1619 = vmatprep.subr.mxu0 0.0
        %1620 = vmatpush1.msra.mxu0 0.0
        %1621 = vmatprep.subr.mxu0 0.0
        %1622 = vmatpush1.msra.mxu0 0.0
        %1623 = vmatprep.subr.mxu0 0.0
        %1624 = vmatpush1.msra.mxu0 0.0
        %1625 = vmatprep.subr.mxu0 0.0
        %1626 = vmatpush1.msra.mxu0 0.0
        %1627 = vmatprep.subr.mxu0 0.0
        %1628 = vmatpush1.msra.mxu0 0.0
        %1629 = vmatprep.subr.mxu0 0.0
        %1630 = vmatpush1.msra.mxu0 0.0
        %1631 = vmatprep.subr.mxu0 0.0
        %1632 = vmatpush1.msra.mxu0 0.0
        %1633 = vmatprep.subr.mxu0 0.0
        %1634 = vmatpush1.msra.mxu0 0.0
        %1635 = vmatprep.subr.mxu0 0.0
        %1636 = vmatpush1.msra.mxu0 0.0
        %1637 = vmatprep.subr.mxu0 0.0
        %1638 = vmatpush1.msra.mxu0 0.0
        %1639 = vmatprep.subr.mxu0 0.0
        %1640 = vmatpush1.msra.mxu0 0.0
        %1641 = vmatprep.subr.mxu0 0.0
        %1642 = vmatpush1.msra.mxu0 0.0
        %1643 = vmatprep.subr.mxu0 0.0
        %1644 = vmatpush1.msra.mxu0 0.0
        %1645 = vmatprep.subr.mxu0 0.0
        %1646 = vmatpush1.msra.mxu0 0.0
        %1647 = vmatprep.subr.mxu0 0.0
        %1648 = vmatpush1.msra.mxu0 0.0
        %1649 = vmatprep.subr.mxu0 0.0
        %1650 = vmatpush1.msra.mxu0 0.0
        %1651 = vmatprep.subr.mxu0 0.0
        %1652 = vmatpush1.msra.mxu0 0.0
        %1653 = vmatprep.mubr.f32.mxu0 0.0
        %1654 = vmatmul.mubr.f32.gmra.mrb[0].mxu0 %v1220
        %v1655 = vpop.f32.mrb[0].mxu0
        %v1656 = vadd.f32 %v1142, %v1655
        %v1657 = vpop.f32.mrb[0].mxu0
        %v1658 = vadd.f32 %v1142, %v1657
        %1659 = vmatprep.mubr.f32.mxu0 0.0
        %1660 = vmatmul.mubr.f32.gmra.mrb[0].mxu0 %v1223
        %v1661 = vpop.f32.mrb[0].mxu0
        %v1662 = vadd.f32 %v1147, %v1661
        %v1663 = vpop.f32.mrb[0].mxu0
        %v1664 = vadd.f32 %v1147, %v1663
        %1665 = vmatprep.mubr.f32.mxu0 0.0
        %1666 = vmatmul.mubr.f32.gmra.mrb[0].mxu0 %v1226
        %v1667 = vpop.f32.mrb[0].mxu0
        %v1668 = vadd.f32 %v1152, %v1667
        %v1669 = vpop.f32.mrb[0].mxu0
        %v1670 = vadd.f32 %v1152, %v1669
        %1671 = vmatprep.mubr.f32.mxu0 0.0
        %1672 = vmatmul.mubr.f32.gmra.mrb[0].mxu0 %v1229
        %v1673 = vpop.f32.mrb[0].mxu0
        %v1674 = vadd.f32 %v1157, %v1673
        %v1675 = vpop.f32.mrb[0].mxu0
        %v1676 = vadd.f32 %v1157, %v1675
        %1677 = vmatprep.mubr.f32.mxu0 0.0
        %1678 = vmatmul.mubr.f32.gmra.mrb[0].mxu0 %v1232
        %v1679 = vpop.f32.mrb[0].mxu0
        %v1680 = vadd.f32 %v1162, %v1679
        %v1681 = vpop.f32.mrb[0].mxu0
        %v1682 = vadd.f32 %v1162, %v1681
        %1683 = vmatprep.mubr.f32.mxu0 0.0
        %1684 = vmatmul.mubr.f32.gmra.mrb[0].mxu0 %v1235
        %v1685 = vpop.f32.mrb[0].mxu0
        %v1686 = vadd.f32 %v1167, %v1685
        %v1687 = vpop.f32.mrb[0].mxu0
        %v1688 = vadd.f32 %v1167, %v1687
        %1689 = vmatprep.mubr.f32.mxu0 0.0
        %1690 = vmatmul.mubr.f32.gmra.mrb[0].mxu0 %v1238
        %v1691 = vpop.f32.mrb[0].mxu0
        %v1692 = vadd.f32 %v1172, %v1691
        %v1693 = vpop.f32.mrb[0].mxu0
        %v1694 = vadd.f32 %v1172, %v1693
        %1695 = vmatprep.mubr.f32.mxu0 0.0
        %1696 = vmatmul.mubr.f32.gmra.mrb[0].mxu0 %v1241
        %v1697 = vpop.f32.mrb[0].mxu0
        %v1698 = vadd.f32 %v1177, %v1697
        %v1699 = vpop.f32.mrb[0].mxu0
        %v1700 = vadd.f32 %v1177, %v1699
        %1701 = vmatprep.mubr.f32.mxu0 0.0
        %1702 = vmatmul.mubr.f32.gmra.mrb[0].mxu0 %v1244
        %v1703 = vpop.f32.mrb[0].mxu0
        %v1704 = vadd.f32 %v1182, %v1703
        %v1705 = vpop.f32.mrb[0].mxu0
        %v1706 = vadd.f32 %v1182, %v1705
        %1707 = vmatprep.mubr.f32.mxu0 0.0
        %1708 = vmatmul.mubr.f32.gmra.mrb[0].mxu0 %v1247
        %v1709 = vpop.f32.mrb[0].mxu0
        %v1710 = vadd.f32 %v1187, %v1709
        %v1711 = vpop.f32.mrb[0].mxu0
        %v1712 = vadd.f32 %v1187, %v1711
        %1713 = vmatprep.mubr.f32.mxu0 0.0
        %1714 = vmatmul.mubr.f32.gmra.mrb[0].mxu0 %v1250
        %v1715 = vpop.f32.mrb[0].mxu0
        %v1716 = vadd.f32 %v1192, %v1715
        %v1717 = vpop.f32.mrb[0].mxu0
        %v1718 = vadd.f32 %v1192, %v1717
        %1719 = vmatprep.mubr.f32.mxu0 0.0
        %1720 = vmatmul.mubr.f32.gmra.mrb[0].mxu0 %v1253
        %v1721 = vpop.f32.mrb[0].mxu0
        %v1722 = vadd.f32 %v1197, %v1721
        %v1723 = vpop.f32.mrb[0].mxu0
        %v1724 = vadd.f32 %v1197, %v1723
        %1725 = vmatprep.mubr.f32.mxu0 0.0
        %1726 = vmatmul.mubr.f32.gmra.mrb[0].mxu0 %v1256
        %v1727 = vpop.f32.mrb[0].mxu0
        %v1728 = vadd.f32 %v1202, %v1727
        %v1729 = vpop.f32.mrb[0].mxu0
        %v1730 = vadd.f32 %v1202, %v1729
        %1731 = vmatprep.mubr.f32.mxu0 0.0
        %1732 = vmatmul.mubr.f32.gmra.mrb[0].mxu0 %v1259
        %v1733 = vpop.f32.mrb[0].mxu0
        %v1734 = vadd.f32 %v1207, %v1733
        %v1735 = vpop.f32.mrb[0].mxu0
        %v1736 = vadd.f32 %v1207, %v1735
        %1737 = vmatprep.mubr.f32.mxu0 0.0
        %1738 = vmatmul.mubr.f32.gmra.mrb[0].mxu0 %v1262
        %v1739 = vpop.f32.mrb[0].mxu0
        %v1740 = vadd.f32 %v1212, %v1739
        %v1741 = vpop.f32.mrb[0].mxu0
        %v1742 = vadd.f32 %v1212, %v1741
        %1743 = vmatprep.mubr.f32.mxu0 0.0
        %1744 = vmatmul.mubr.f32.gmra.mrb[0].mxu0 %v1265
        %v1745 = vpop.f32.mrb[0].mxu0
        %v1746 = vadd.f32 %v1217, %v1745
        %v1747 = vpop.f32.mrb[0].mxu0
        %v1748 = vadd.f32 %v1217, %v1747
        %1749 = vdwg.mxu0
        %1750 = vmatprep.subr.mxu0 %v1082
        %1751 = vmatpush1.msra.mxu0 %v1081
        %1752 = vmatprep.subr.mxu0 %v1090
        %1753 = vmatpush1.msra.mxu0 %v1089
        %1754 = vmatprep.subr.mxu0 %v1098
        %1755 = vmatpush1.msra.mxu0 %v1097
        %1756 = vmatprep.subr.mxu0 %v1106
        %1757 = vmatpush1.msra.mxu0 %v1105
        %1758 = vmatprep.subr.mxu0 0.0
        %1759 = vmatpush1.msra.mxu0 0.0
        %1760 = vmatprep.subr.mxu0 0.0
        %1761 = vmatpush1.msra.mxu0 0.0
        %1762 = vmatprep.subr.mxu0 0.0
        %1763 = vmatpush1.msra.mxu0 0.0
        %1764 = vmatprep.subr.mxu0 0.0
        %1765 = vmatpush1.msra.mxu0 0.0
        %1766 = vmatprep.subr.mxu0 0.0
        %1767 = vmatpush1.msra.mxu0 0.0
        %1768 = vmatprep.subr.mxu0 0.0
        %1769 = vmatpush1.msra.mxu0 0.0
        %1770 = vmatprep.subr.mxu0 0.0
        %1771 = vmatpush1.msra.mxu0 0.0
        %1772 = vmatprep.subr.mxu0 0.0
        %1773 = vmatpush1.msra.mxu0 0.0
        %1774 = vmatprep.subr.mxu0 0.0
        %1775 = vmatpush1.msra.mxu0 0.0
        %1776 = vmatprep.subr.mxu0 0.0
        %1777 = vmatpush1.msra.mxu0 0.0
        %1778 = vmatprep.subr.mxu0 0.0
        %1779 = vmatpush1.msra.mxu0 0.0
        %1780 = vmatprep.subr.mxu0 0.0
        %1781 = vmatpush1.msra.mxu0 0.0
        %1782 = vmatprep.subr.mxu0 0.0
        %1783 = vmatpush1.msra.mxu0 0.0
        %1784 = vmatprep.subr.mxu0 0.0
        %1785 = vmatpush1.msra.mxu0 0.0
        %1786 = vmatprep.subr.mxu0 0.0
        %1787 = vmatpush1.msra.mxu0 0.0
        %1788 = vmatprep.subr.mxu0 0.0
        %1789 = vmatpush1.msra.mxu0 0.0
        %1790 = vmatprep.subr.mxu0 0.0
        %1791 = vmatpush1.msra.mxu0 0.0
        %1792 = vmatprep.subr.mxu0 0.0
        %1793 = vmatpush1.msra.mxu0 0.0
        %1794 = vmatprep.subr.mxu0 0.0
        %1795 = vmatpush1.msra.mxu0 0.0
        %1796 = vmatprep.subr.mxu0 0.0
        %1797 = vmatpush1.msra.mxu0 0.0
        %1798 = vmatprep.subr.mxu0 0.0
        %1799 = vmatpush1.msra.mxu0 0.0
        %1800 = vmatprep.subr.mxu0 0.0
        %1801 = vmatpush1.msra.mxu0 0.0
        %1802 = vmatprep.subr.mxu0 0.0
        %1803 = vmatpush1.msra.mxu0 0.0
        %1804 = vmatprep.subr.mxu0 0.0
        %1805 = vmatpush1.msra.mxu0 0.0
        %1806 = vmatprep.subr.mxu0 0.0
        %1807 = vmatpush1.msra.mxu0 0.0
        %1808 = vmatprep.subr.mxu0 0.0
        %1809 = vmatpush1.msra.mxu0 0.0
        %1810 = vmatprep.subr.mxu0 0.0
        %1811 = vmatpush1.msra.mxu0 0.0
        %1812 = vmatprep.subr.mxu0 0.0
        %1813 = vmatpush1.msra.mxu0 0.0
        %1814 = vmatprep.mubr.f32.mxu0 0.0
        %1815 = vmatmul.mubr.f32.gmra.mrb[0].mxu0 %v1220
        %v1816 = vpop.f32.mrb[0].mxu0
        %v1817 = vadd.f32 %v1142, %v1816
        %v1818 = vpop.f32.mrb[0].mxu0
        %v1819 = vadd.f32 %v1142, %v1818
        %1820 = vmatprep.mubr.f32.mxu0 0.0
        %1821 = vmatmul.mubr.f32.gmra.mrb[0].mxu0 %v1223
        %v1822 = vpop.f32.mrb[0].mxu0
        %v1823 = vadd.f32 %v1147, %v1822
        %v1824 = vpop.f32.mrb[0].mxu0
        %v1825 = vadd.f32 %v1147, %v1824
        %1826 = vmatprep.mubr.f32.mxu0 0.0
        %1827 = vmatmul.mubr.f32.gmra.mrb[0].mxu0 %v1226
        %v1828 = vpop.f32.mrb[0].mxu0
        %v1829 = vadd.f32 %v1152, %v1828
        %v1830 = vpop.f32.mrb[0].mxu0
        %v1831 = vadd.f32 %v1152, %v1830
        %1832 = vmatprep.mubr.f32.mxu0 0.0
        %1833 = vmatmul.mubr.f32.gmra.mrb[0].mxu0 %v1229
        %v1834 = vpop.f32.mrb[0].mxu0
        %v1835 = vadd.f32 %v1157, %v1834
        %v1836 = vpop.f32.mrb[0].mxu0
        %v1837 = vadd.f32 %v1157, %v1836
        %1838 = vmatprep.mubr.f32.mxu0 0.0
        %1839 = vmatmul.mubr.f32.gmra.mrb[0].mxu0 %v1232
        %v1840 = vpop.f32.mrb[0].mxu0
        %v1841 = vadd.f32 %v1162, %v1840
        %v1842 = vpop.f32.mrb[0].mxu0
        %v1843 = vadd.f32 %v1162, %v1842
        %1844 = vmatprep.mubr.f32.mxu0 0.0
        %1845 = vmatmul.mubr.f32.gmra.mrb[0].mxu0 %v1235
        %v1846 = vpop.f32.mrb[0].mxu0
        %v1847 = vadd.f32 %v1167, %v1846
        %v1848 = vpop.f32.mrb[0].mxu0
        %v1849 = vadd.f32 %v1167, %v1848
        %1850 = vmatprep.mubr.f32.mxu0 0.0
        %1851 = vmatmul.mubr.f32.gmra.mrb[0].mxu0 %v1238
        %v1852 = vpop.f32.mrb[0].mxu0
        %v1853 = vadd.f32 %v1172, %v1852
        %v1854 = vpop.f32.mrb[0].mxu0
        %v1855 = vadd.f32 %v1172, %v1854
        %1856 = vmatprep.mubr.f32.mxu0 0.0
        %1857 = vmatmul.mubr.f32.gmra.mrb[0].mxu0 %v1241
        %v1858 = vpop.f32.mrb[0].mxu0
        %v1859 = vadd.f32 %v1177, %v1858
        %v1860 = vpop.f32.mrb[0].mxu0
        %v1861 = vadd.f32 %v1177, %v1860
        %1862 = vmatprep.mubr.f32.mxu0 0.0
        %1863 = vmatmul.mubr.f32.gmra.mrb[0].mxu0 %v1244
        %v1864 = vpop.f32.mrb[0].mxu0
        %v1865 = vadd.f32 %v1182, %v1864
        %v1866 = vpop.f32.mrb[0].mxu0
        %v1867 = vadd.f32 %v1182, %v1866
        %1868 = vmatprep.mubr.f32.mxu0 0.0
        %1869 = vmatmul.mubr.f32.gmra.mrb[0].mxu0 %v1247
        %v1870 = vpop.f32.mrb[0].mxu0
        %v1871 = vadd.f32 %v1187, %v1870
        %v1872 = vpop.f32.mrb[0].mxu0
        %v1873 = vadd.f32 %v1187, %v1872
        %1874 = vmatprep.mubr.f32.mxu0 0.0
        %1875 = vmatmul.mubr.f32.gmra.mrb[0].mxu0 %v1250
        %v1876 = vpop.f32.mrb[0].mxu0
        %v1877 = vadd.f32 %v1192, %v1876
        %v1878 = vpop.f32.mrb[0].mxu0
        %v1879 = vadd.f32 %v1192, %v1878
        %1880 = vmatprep.mubr.f32.mxu0 0.0
        %1881 = vmatmul.mubr.f32.gmra.mrb[0].mxu0 %v1253
        %v1882 = vpop.f32.mrb[0].mxu0
        %v1883 = vadd.f32 %v1197, %v1882
        %v1884 = vpop.f32.mrb[0].mxu0
        %v1885 = vadd.f32 %v1197, %v1884
        %1886 = vmatprep.mubr.f32.mxu0 0.0
        %1887 = vmatmul.mubr.f32.gmra.mrb[0].mxu0 %v1256
        %v1888 = vpop.f32.mrb[0].mxu0
        %v1889 = vadd.f32 %v1202, %v1888
        %v1890 = vpop.f32.mrb[0].mxu0
        %v1891 = vadd.f32 %v1202, %v1890
        %1892 = vmatprep.mubr.f32.mxu0 0.0
        %1893 = vmatmul.mubr.f32.gmra.mrb[0].mxu0 %v1259
        %v1894 = vpop.f32.mrb[0].mxu0
        %v1895 = vadd.f32 %v1207, %v1894
        %v1896 = vpop.f32.mrb[0].mxu0
        %v1897 = vadd.f32 %v1207, %v1896
        %1898 = vmatprep.mubr.f32.mxu0 0.0
        %1899 = vmatmul.mubr.f32.gmra.mrb[0].mxu0 %v1262
        %v1900 = vpop.f32.mrb[0].mxu0
        %v1901 = vadd.f32 %v1212, %v1900
        %v1902 = vpop.f32.mrb[0].mxu0
        %v1903 = vadd.f32 %v1212, %v1902
        %1904 = vmatprep.mubr.f32.mxu0 0.0
        %1905 = vmatmul.mubr.f32.gmra.mrb[0].mxu0 %v1265
        %v1906 = vpop.f32.mrb[0].mxu0
        %v1907 = vadd.f32 %v1217, %v1906
        %v1908 = vpop.f32.mrb[0].mxu0
        %v1909 = vadd.f32 %v1217, %v1908
        %1910 = vdwg.mxu0
        %v1911 = vld [vmem:[%s1 + $0xc0] sm:$0xff]
        %v1912 = vld [vmem:[%s1 + $0xc8] sm:$0xff]
        %v1913 = vld [vmem:[%s1 + $0xd0] sm:$0xff]
        %v1914 = vld [vmem:[%s1 + $0xd8] sm:$0xff]
        %v1915 = vmax.f32 %v1334, 0.0
        %v1916 = vmax.f32 %v1336, 0.0
        %v1917 = vmax.f32 %v1495, 0.0
        %v1918 = vmax.f32 %v1497, 0.0
        %v1919 = vmax.f32 %v1656, 0.0
        %v1920 = vmax.f32 %v1658, 0.0
        %v1921 = vmax.f32 %v1817, 0.0
        %v1922 = vmax.f32 %v1819, 0.0
        %v1923 = vmax.f32 %v1340, 0.0
        %v1924 = vmax.f32 %v1342, 0.0
        %v1925 = vmax.f32 %v1501, 0.0
        %v1926 = vmax.f32 %v1503, 0.0
        %v1927 = vmax.f32 %v1662, 0.0
        %v1928 = vmax.f32 %v1664, 0.0
        %v1929 = vmax.f32 %v1823, 0.0
        %v1930 = vmax.f32 %v1825, 0.0
        %v1931 = vmax.f32 %v1346, 0.0
        %v1932 = vmax.f32 %v1348, 0.0
        %v1933 = vmax.f32 %v1507, 0.0
        %v1934 = vmax.f32 %v1509, 0.0
        %v1935 = vmax.f32 %v1668, 0.0
        %v1936 = vmax.f32 %v1670, 0.0
        %v1937 = vmax.f32 %v1829, 0.0
        %v1938 = vmax.f32 %v1831, 0.0
        %v1939 = vmax.f32 %v1352, 0.0
        %v1940 = vmax.f32 %v1354, 0.0
        %v1941 = vmax.f32 %v1513, 0.0
        %v1942 = vmax.f32 %v1515, 0.0
        %v1943 = vmax.f32 %v1674, 0.0
        %v1944 = vmax.f32 %v1676, 0.0
        %v1945 = vmax.f32 %v1835, 0.0
        %v1946 = vmax.f32 %v1837, 0.0
        %v1947 = vmax.f32 %v1358, 0.0
        %v1948 = vmax.f32 %v1360, 0.0
        %v1949 = vmax.f32 %v1519, 0.0
        %v1950 = vmax.f32 %v1521, 0.0
        %v1951 = vmax.f32 %v1680, 0.0
        %v1952 = vmax.f32 %v1682, 0.0
        %v1953 = vmax.f32 %v1841, 0.0
        %v1954 = vmax.f32 %v1843, 0.0
        %v1955 = vmax.f32 %v1364, 0.0
        %v1956 = vmax.f32 %v1366, 0.0
        %v1957 = vmax.f32 %v1525, 0.0
        %v1958 = vmax.f32 %v1527, 0.0
        %v1959 = vmax.f32 %v1686, 0.0
        %v1960 = vmax.f32 %v1688, 0.0
        %v1961 = vmax.f32 %v1847, 0.0
        %v1962 = vmax.f32 %v1849, 0.0
        %v1963 = vmax.f32 %v1370, 0.0
        %v1964 = vmax.f32 %v1372, 0.0
        %v1965 = vmax.f32 %v1531, 0.0
        %v1966 = vmax.f32 %v1533, 0.0
        %v1967 = vmax.f32 %v1692, 0.0
        %v1968 = vmax.f32 %v1694, 0.0
        %v1969 = vmax.f32 %v1853, 0.0
        %v1970 = vmax.f32 %v1855, 0.0
        %v1971 = vmax.f32 %v1376, 0.0
        %v1972 = vmax.f32 %v1378, 0.0
        %v1973 = vmax.f32 %v1537, 0.0
        %v1974 = vmax.f32 %v1539, 0.0
        %v1975 = vmax.f32 %v1698, 0.0
        %v1976 = vmax.f32 %v1700, 0.0
        %v1977 = vmax.f32 %v1859, 0.0
        %v1978 = vmax.f32 %v1861, 0.0
        %v1979 = vmax.f32 %v1382, 0.0
        %v1980 = vmax.f32 %v1384, 0.0
        %v1981 = vmax.f32 %v1543, 0.0
        %v1982 = vmax.f32 %v1545, 0.0
        %v1983 = vmax.f32 %v1704, 0.0
        %v1984 = vmax.f32 %v1706, 0.0
        %v1985 = vmax.f32 %v1865, 0.0
        %v1986 = vmax.f32 %v1867, 0.0
        %v1987 = vmax.f32 %v1388, 0.0
        %v1988 = vmax.f32 %v1390, 0.0
        %v1989 = vmax.f32 %v1549, 0.0
        %v1990 = vmax.f32 %v1551, 0.0
        %v1991 = vmax.f32 %v1710, 0.0
        %v1992 = vmax.f32 %v1712, 0.0
        %v1993 = vmax.f32 %v1871, 0.0
        %v1994 = vmax.f32 %v1873, 0.0
        %v1995 = vmax.f32 %v1394, 0.0
        %v1996 = vmax.f32 %v1396, 0.0
        %v1997 = vmax.f32 %v1555, 0.0
        %v1998 = vmax.f32 %v1557, 0.0
        %v1999 = vmax.f32 %v1716, 0.0
        %v2000 = vmax.f32 %v1718, 0.0
        %v2001 = vmax.f32 %v1877, 0.0
        %v2002 = vmax.f32 %v1879, 0.0
        %v2003 = vmax.f32 %v1400, 0.0
        %v2004 = vmax.f32 %v1402, 0.0
        %v2005 = vmax.f32 %v1561, 0.0
        %v2006 = vmax.f32 %v1563, 0.0
        %v2007 = vmax.f32 %v1722, 0.0
        %v2008 = vmax.f32 %v1724, 0.0
        %v2009 = vmax.f32 %v1883, 0.0
        %v2010 = vmax.f32 %v1885, 0.0
        %v2011 = vmax.f32 %v1406, 0.0
        %v2012 = vmax.f32 %v1408, 0.0
        %v2013 = vmax.f32 %v1567, 0.0
        %v2014 = vmax.f32 %v1569, 0.0
        %v2015 = vmax.f32 %v1728, 0.0
        %v2016 = vmax.f32 %v1730, 0.0
        %v2017 = vmax.f32 %v1889, 0.0
        %v2018 = vmax.f32 %v1891, 0.0
        %v2019 = vmax.f32 %v1412, 0.0
        %v2020 = vmax.f32 %v1414, 0.0
        %v2021 = vmax.f32 %v1573, 0.0
        %v2022 = vmax.f32 %v1575, 0.0
        %v2023 = vmax.f32 %v1734, 0.0
        %v2024 = vmax.f32 %v1736, 0.0
        %v2025 = vmax.f32 %v1895, 0.0
        %v2026 = vmax.f32 %v1897, 0.0
        %v2027 = vmax.f32 %v1418, 0.0
        %v2028 = vmax.f32 %v1420, 0.0
        %v2029 = vmax.f32 %v1579, 0.0
        %v2030 = vmax.f32 %v1581, 0.0
        %v2031 = vmax.f32 %v1740, 0.0
        %v2032 = vmax.f32 %v1742, 0.0
        %v2033 = vmax.f32 %v1901, 0.0
        %v2034 = vmax.f32 %v1903, 0.0
        %v2035 = vmax.f32 %v1424, 0.0
        %v2036 = vmax.f32 %v1426, 0.0
        %v2037 = vmax.f32 %v1585, 0.0
        %v2038 = vmax.f32 %v1587, 0.0
        %v2039 = vmax.f32 %v1746, 0.0
        %v2040 = vmax.f32 %v1748, 0.0
        %v2041 = vmax.f32 %v1907, 0.0
        %v2042 = vmax.f32 %v1909, 0.0
        %v2043 = vld [vmem:[%s2 + $0xc0] sm:$0xff]
        %v2044 = vld [vmem:[%s2 + $0xc8] sm:$0xff]
        %v2045 = vld [vmem:[%s2 + $0xd0] sm:$0xff]
        %v2046 = vld [vmem:[%s2 + $0xd8] sm:$0xff]
        %2048 = vset.pattern.permute.xlu0 0
        %2049 = vperm.xlu0 %2048, %v2043
        %v2050 = vpop.permute.xlu0 %2049
        %2053 = vset.pattern.permute.xlu0 0
        %2054 = vperm.xlu0 %2053, %v2044
        %v2055 = vpop.permute.xlu0 %2054
        %2058 = vset.pattern.permute.xlu0 0
        %2059 = vperm.xlu0 %2058, %v2045
        %v2060 = vpop.permute.xlu0 %2059
        %2063 = vset.pattern.permute.xlu0 0
        %2064 = vperm.xlu0 %2063, %v2046
        %v2065 = vpop.permute.xlu0 %2064
        %2067 = vmatprep.subr.mxu0 %v1916
        %2068 = vmatpush1.msra.mxu0 %v1915
        %2069 = vmatprep.subr.mxu0 %v1924
        %2070 = vmatpush1.msra.mxu0 %v1923
        %2071 = vmatprep.subr.mxu0 %v1932
        %2072 = vmatpush1.msra.mxu0 %v1931
        %2073 = vmatprep.subr.mxu0 %v1940
        %2074 = vmatpush1.msra.mxu0 %v1939
        %2075 = vmatprep.subr.mxu0 %v1948
        %2076 = vmatpush1.msra.mxu0 %v1947
        %2077 = vmatprep.subr.mxu0 %v1956
        %2078 = vmatpush1.msra.mxu0 %v1955
        %2079 = vmatprep.subr.mxu0 %v1964
        %2080 = vmatpush1.msra.mxu0 %v1963
        %2081 = vmatprep.subr.mxu0 %v1972
        %2082 = vmatpush1.msra.mxu0 %v1971
        %2083 = vmatprep.subr.mxu0 %v1980
        %2084 = vmatpush1.msra.mxu0 %v1979
        %2085 = vmatprep.subr.mxu0 %v1988
        %2086 = vmatpush1.msra.mxu0 %v1987
        %2087 = vmatprep.subr.mxu0 %v1996
        %2088 = vmatpush1.msra.mxu0 %v1995
        %2089 = vmatprep.subr.mxu0 %v2004
        %2090 = vmatpush1.msra.mxu0 %v2003
        %2091 = vmatprep.subr.mxu0 %v2012
        %2092 = vmatpush1.msra.mxu0 %v2011
        %2093 = vmatprep.subr.mxu0 %v2020
        %2094 = vmatpush1.msra.mxu0 %v2019
        %2095 = vmatprep.subr.mxu0 %v2028
        %2096 = vmatpush1.msra.mxu0 %v2027
        %2097 = vmatprep.subr.mxu0 %v2036
        %2098 = vmatpush1.msra.mxu0 %v2035
        %2099 = vmatprep.subr.mxu0 0.0
        %2100 = vmatpush1.msra.mxu0 0.0
        %2101 = vmatprep.subr.mxu0 0.0
        %2102 = vmatpush1.msra.mxu0 0.0
        %2103 = vmatprep.subr.mxu0 0.0
        %2104 = vmatpush1.msra.mxu0 0.0
        %2105 = vmatprep.subr.mxu0 0.0
        %2106 = vmatpush1.msra.mxu0 0.0
        %2107 = vmatprep.subr.mxu0 0.0
        %2108 = vmatpush1.msra.mxu0 0.0
        %2109 = vmatprep.subr.mxu0 0.0
        %2110 = vmatpush1.msra.mxu0 0.0
        %2111 = vmatprep.subr.mxu0 0.0
        %2112 = vmatpush1.msra.mxu0 0.0
        %2113 = vmatprep.subr.mxu0 0.0
        %2114 = vmatpush1.msra.mxu0 0.0
        %2115 = vmatprep.subr.mxu0 0.0
        %2116 = vmatpush1.msra.mxu0 0.0
        %2117 = vmatprep.subr.mxu0 0.0
        %2118 = vmatpush1.msra.mxu0 0.0
        %2119 = vmatprep.subr.mxu0 0.0
        %2120 = vmatpush1.msra.mxu0 0.0
        %2121 = vmatprep.subr.mxu0 0.0
        %2122 = vmatpush1.msra.mxu0 0.0
        %2123 = vmatprep.subr.mxu0 0.0
        %2124 = vmatpush1.msra.mxu0 0.0
        %2125 = vmatprep.subr.mxu0 0.0
        %2126 = vmatpush1.msra.mxu0 0.0
        %2127 = vmatprep.subr.mxu0 0.0
        %2128 = vmatpush1.msra.mxu0 0.0
        %2129 = vmatprep.subr.mxu0 0.0
        %2130 = vmatpush1.msra.mxu0 0.0
        %2131 = vmatprep.mubr.f32.mxu0 0.0
        %2132 = vmatmul.mubr.f32.gmra.mrb[0].mxu0 %v1911
        %v2133 = vpop.f32.mrb[0].mxu0
        %v2134 = vadd.f32 %v2050, %v2133
        %v2135 = vpop.f32.mrb[0].mxu0
        %v2136 = vadd.f32 %v2050, %v2135
        %2137 = vmatprep.mubr.f32.mxu0 0.0
        %2138 = vmatmul.mubr.f32.gmra.mrb[0].mxu0 %v1912
        %v2139 = vpop.f32.mrb[0].mxu0
        %v2140 = vadd.f32 %v2055, %v2139
        %v2141 = vpop.f32.mrb[0].mxu0
        %v2142 = vadd.f32 %v2055, %v2141
        %2143 = vmatprep.mubr.f32.mxu0 0.0
        %2144 = vmatmul.mubr.f32.gmra.mrb[0].mxu0 %v1913
        %v2145 = vpop.f32.mrb[0].mxu0
        %v2146 = vadd.f32 %v2060, %v2145
        %v2147 = vpop.f32.mrb[0].mxu0
        %v2148 = vadd.f32 %v2060, %v2147
        %2149 = vmatprep.mubr.f32.mxu0 0.0
        %2150 = vmatmul.mubr.f32.gmra.mrb[0].mxu0 %v1914
        %v2151 = vpop.f32.mrb[0].mxu0
        %v2152 = vadd.f32 %v2065, %v2151
        %v2153 = vpop.f32.mrb[0].mxu0
        %v2154 = vadd.f32 %v2065, %v2153
        %2155 = vdwg.mxu0
        %2156 = vmatprep.subr.mxu0 %v1918
        %2157 = vmatpush1.msra.mxu0 %v1917
        %2158 = vmatprep.subr.mxu0 %v1926
        %2159 = vmatpush1.msra.mxu0 %v1925
        %2160 = vmatprep.subr.mxu0 %v1934
        %2161 = vmatpush1.msra.mxu0 %v1933
        %2162 = vmatprep.subr.mxu0 %v1942
        %2163 = vmatpush1.msra.mxu0 %v1941
        %2164 = vmatprep.subr.mxu0 %v1950
        %2165 = vmatpush1.msra.mxu0 %v1949
        %2166 = vmatprep.subr.mxu0 %v1958
        %2167 = vmatpush1.msra.mxu0 %v1957
        %2168 = vmatprep.subr.mxu0 %v1966
        %2169 = vmatpush1.msra.mxu0 %v1965
        %2170 = vmatprep.subr.mxu0 %v1974
        %2171 = vmatpush1.msra.mxu0 %v1973
        %2172 = vmatprep.subr.mxu0 %v1982
        %2173 = vmatpush1.msra.mxu0 %v1981
        %2174 = vmatprep.subr.mxu0 %v1990
        %2175 = vmatpush1.msra.mxu0 %v1989
        %2176 = vmatprep.subr.mxu0 %v1998
        %2177 = vmatpush1.msra.mxu0 %v1997
        %2178 = vmatprep.subr.mxu0 %v2006
        %2179 = vmatpush1.msra.mxu0 %v2005
        %2180 = vmatprep.subr.mxu0 %v2014
        %2181 = vmatpush1.msra.mxu0 %v2013
        %2182 = vmatprep.subr.mxu0 %v2022
        %2183 = vmatpush1.msra.mxu0 %v2021
        %2184 = vmatprep.subr.mxu0 %v2030
        %2185 = vmatpush1.msra.mxu0 %v2029
        %2186 = vmatprep.subr.mxu0 %v2038
        %2187 = vmatpush1.msra.mxu0 %v2037
        %2188 = vmatprep.subr.mxu0 0.0
        %2189 = vmatpush1.msra.mxu0 0.0
        %2190 = vmatprep.subr.mxu0 0.0
        %2191 = vmatpush1.msra.mxu0 0.0
        %2192 = vmatprep.subr.mxu0 0.0
        %2193 = vmatpush1.msra.mxu0 0.0
        %2194 = vmatprep.subr.mxu0 0.0
        %2195 = vmatpush1.msra.mxu0 0.0
        %2196 = vmatprep.subr.mxu0 0.0
        %2197 = vmatpush1.msra.mxu0 0.0
        %2198 = vmatprep.subr.mxu0 0.0
        %2199 = vmatpush1.msra.mxu0 0.0
        %2200 = vmatprep.subr.mxu0 0.0
        %2201 = vmatpush1.msra.mxu0 0.0
        %2202 = vmatprep.subr.mxu0 0.0
        %2203 = vmatpush1.msra.mxu0 0.0
        %2204 = vmatprep.subr.mxu0 0.0
        %2205 = vmatpush1.msra.mxu0 0.0
        %2206 = vmatprep.subr.mxu0 0.0
        %2207 = vmatpush1.msra.mxu0 0.0
        %2208 = vmatprep.subr.mxu0 0.0
        %2209 = vmatpush1.msra.mxu0 0.0
        %2210 = vmatprep.subr.mxu0 0.0
        %2211 = vmatpush1.msra.mxu0 0.0
        %2212 = vmatprep.subr.mxu0 0.0
        %2213 = vmatpush1.msra.mxu0 0.0
        %2214 = vmatprep.subr.mxu0 0.0
        %2215 = vmatpush1.msra.mxu0 0.0
        %2216 = vmatprep.subr.mxu0 0.0
        %2217 = vmatpush1.msra.mxu0 0.0
        %2218 = vmatprep.subr.mxu0 0.0
        %2219 = vmatpush1.msra.mxu0 0.0
        %2220 = vmatprep.mubr.f32.mxu0 0.0
        %2221 = vmatmul.mubr.f32.gmra.mrb[0].mxu0 %v1911
        %v2222 = vpop.f32.mrb[0].mxu0
        %v2223 = vadd.f32 %v2050, %v2222
        %v2224 = vpop.f32.mrb[0].mxu0
        %v2225 = vadd.f32 %v2050, %v2224
        %2226 = vmatprep.mubr.f32.mxu0 0.0
        %2227 = vmatmul.mubr.f32.gmra.mrb[0].mxu0 %v1912
        %v2228 = vpop.f32.mrb[0].mxu0
        %v2229 = vadd.f32 %v2055, %v2228
        %v2230 = vpop.f32.mrb[0].mxu0
        %v2231 = vadd.f32 %v2055, %v2230
        %2232 = vmatprep.mubr.f32.mxu0 0.0
        %2233 = vmatmul.mubr.f32.gmra.mrb[0].mxu0 %v1913
        %v2234 = vpop.f32.mrb[0].mxu0
        %v2235 = vadd.f32 %v2060, %v2234
        %v2236 = vpop.f32.mrb[0].mxu0
        %v2237 = vadd.f32 %v2060, %v2236
        %2238 = vmatprep.mubr.f32.mxu0 0.0
        %2239 = vmatmul.mubr.f32.gmra.mrb[0].mxu0 %v1914
        %v2240 = vpop.f32.mrb[0].mxu0
        %v2241 = vadd.f32 %v2065, %v2240
        %v2242 = vpop.f32.mrb[0].mxu0
        %v2243 = vadd.f32 %v2065, %v2242
        %2244 = vdwg.mxu0
        %2245 = vmatprep.subr.mxu0 %v1920
        %2246 = vmatpush1.msra.mxu0 %v1919
        %2247 = vmatprep.subr.mxu0 %v1928
        %2248 = vmatpush1.msra.mxu0 %v1927
        %2249 = vmatprep.subr.mxu0 %v1936
        %2250 = vmatpush1.msra.mxu0 %v1935
        %2251 = vmatprep.subr.mxu0 %v1944
        %2252 = vmatpush1.msra.mxu0 %v1943
        %2253 = vmatprep.subr.mxu0 %v1952
        %2254 = vmatpush1.msra.mxu0 %v1951
        %2255 = vmatprep.subr.mxu0 %v1960
        %2256 = vmatpush1.msra.mxu0 %v1959
        %2257 = vmatprep.subr.mxu0 %v1968
        %2258 = vmatpush1.msra.mxu0 %v1967
        %2259 = vmatprep.subr.mxu0 %v1976
        %2260 = vmatpush1.msra.mxu0 %v1975
        %2261 = vmatprep.subr.mxu0 %v1984
        %2262 = vmatpush1.msra.mxu0 %v1983
        %2263 = vmatprep.subr.mxu0 %v1992
        %2264 = vmatpush1.msra.mxu0 %v1991
        %2265 = vmatprep.subr.mxu0 %v2000
        %2266 = vmatpush1.msra.mxu0 %v1999
        %2267 = vmatprep.subr.mxu0 %v2008
        %2268 = vmatpush1.msra.mxu0 %v2007
        %2269 = vmatprep.subr.mxu0 %v2016
        %2270 = vmatpush1.msra.mxu0 %v2015
        %2271 = vmatprep.subr.mxu0 %v2024
        %2272 = vmatpush1.msra.mxu0 %v2023
        %2273 = vmatprep.subr.mxu0 %v2032
        %2274 = vmatpush1.msra.mxu0 %v2031
        %2275 = vmatprep.subr.mxu0 %v2040
        %2276 = vmatpush1.msra.mxu0 %v2039
        %2277 = vmatprep.subr.mxu0 0.0
        %2278 = vmatpush1.msra.mxu0 0.0
        %2279 = vmatprep.subr.mxu0 0.0
        %2280 = vmatpush1.msra.mxu0 0.0
        %2281 = vmatprep.subr.mxu0 0.0
        %2282 = vmatpush1.msra.mxu0 0.0
        %2283 = vmatprep.subr.mxu0 0.0
        %2284 = vmatpush1.msra.mxu0 0.0
        %2285 = vmatprep.subr.mxu0 0.0
        %2286 = vmatpush1.msra.mxu0 0.0
        %2287 = vmatprep.subr.mxu0 0.0
        %2288 = vmatpush1.msra.mxu0 0.0
        %2289 = vmatprep.subr.mxu0 0.0
        %2290 = vmatpush1.msra.mxu0 0.0
        %2291 = vmatprep.subr.mxu0 0.0
        %2292 = vmatpush1.msra.mxu0 0.0
        %2293 = vmatprep.subr.mxu0 0.0
        %2294 = vmatpush1.msra.mxu0 0.0
        %2295 = vmatprep.subr.mxu0 0.0
        %2296 = vmatpush1.msra.mxu0 0.0
        %2297 = vmatprep.subr.mxu0 0.0
        %2298 = vmatpush1.msra.mxu0 0.0
        %2299 = vmatprep.subr.mxu0 0.0
        %2300 = vmatpush1.msra.mxu0 0.0
        %2301 = vmatprep.subr.mxu0 0.0
        %2302 = vmatpush1.msra.mxu0 0.0
        %2303 = vmatprep.subr.mxu0 0.0
        %2304 = vmatpush1.msra.mxu0 0.0
        %2305 = vmatprep.subr.mxu0 0.0
        %2306 = vmatpush1.msra.mxu0 0.0
        %2307 = vmatprep.subr.mxu0 0.0
        %2308 = vmatpush1.msra.mxu0 0.0
        %2309 = vmatprep.mubr.f32.mxu0 0.0
        %2310 = vmatmul.mubr.f32.gmra.mrb[0].mxu0 %v1911
        %v2311 = vpop.f32.mrb[0].mxu0
        %v2312 = vadd.f32 %v2050, %v2311
        %v2313 = vpop.f32.mrb[0].mxu0
        %v2314 = vadd.f32 %v2050, %v2313
        %2315 = vmatprep.mubr.f32.mxu0 0.0
        %2316 = vmatmul.mubr.f32.gmra.mrb[0].mxu0 %v1912
        %v2317 = vpop.f32.mrb[0].mxu0
        %v2318 = vadd.f32 %v2055, %v2317
        %v2319 = vpop.f32.mrb[0].mxu0
        %v2320 = vadd.f32 %v2055, %v2319
        %2321 = vmatprep.mubr.f32.mxu0 0.0
        %2322 = vmatmul.mubr.f32.gmra.mrb[0].mxu0 %v1913
        %v2323 = vpop.f32.mrb[0].mxu0
        %v2324 = vadd.f32 %v2060, %v2323
        %v2325 = vpop.f32.mrb[0].mxu0
        %v2326 = vadd.f32 %v2060, %v2325
        %2327 = vmatprep.mubr.f32.mxu0 0.0
        %2328 = vmatmul.mubr.f32.gmra.mrb[0].mxu0 %v1914
        %v2329 = vpop.f32.mrb[0].mxu0
        %v2330 = vadd.f32 %v2065, %v2329
        %v2331 = vpop.f32.mrb[0].mxu0
        %v2332 = vadd.f32 %v2065, %v2331
        %2333 = vdwg.mxu0
        %2334 = vmatprep.subr.mxu0 %v1922
        %2335 = vmatpush1.msra.mxu0 %v1921
        %2336 = vmatprep.subr.mxu0 %v1930
        %2337 = vmatpush1.msra.mxu0 %v1929
        %2338 = vmatprep.subr.mxu0 %v1938
        %2339 = vmatpush1.msra.mxu0 %v1937
        %2340 = vmatprep.subr.mxu0 %v1946
        %2341 = vmatpush1.msra.mxu0 %v1945
        %2342 = vmatprep.subr.mxu0 %v1954
        %2343 = vmatpush1.msra.mxu0 %v1953
        %2344 = vmatprep.subr.mxu0 %v1962
        %2345 = vmatpush1.msra.mxu0 %v1961
        %2346 = vmatprep.subr.mxu0 %v1970
        %2347 = vmatpush1.msra.mxu0 %v1969
        %2348 = vmatprep.subr.mxu0 %v1978
        %2349 = vmatpush1.msra.mxu0 %v1977
        %2350 = vmatprep.subr.mxu0 %v1986
        %2351 = vmatpush1.msra.mxu0 %v1985
        %2352 = vmatprep.subr.mxu0 %v1994
        %2353 = vmatpush1.msra.mxu0 %v1993
        %2354 = vmatprep.subr.mxu0 %v2002
        %2355 = vmatpush1.msra.mxu0 %v2001
        %2356 = vmatprep.subr.mxu0 %v2010
        %2357 = vmatpush1.msra.mxu0 %v2009
        %2358 = vmatprep.subr.mxu0 %v2018
        %2359 = vmatpush1.msra.mxu0 %v2017
        %2360 = vmatprep.subr.mxu0 %v2026
        %2361 = vmatpush1.msra.mxu0 %v2025
        %2362 = vmatprep.subr.mxu0 %v2034
        %2363 = vmatpush1.msra.mxu0 %v2033
        %2364 = vmatprep.subr.mxu0 %v2042
        %2365 = vmatpush1.msra.mxu0 %v2041
        %2366 = vmatprep.subr.mxu0 0.0
        %2367 = vmatpush1.msra.mxu0 0.0
        %2368 = vmatprep.subr.mxu0 0.0
        %2369 = vmatpush1.msra.mxu0 0.0
        %2370 = vmatprep.subr.mxu0 0.0
        %2371 = vmatpush1.msra.mxu0 0.0
        %2372 = vmatprep.subr.mxu0 0.0
        %2373 = vmatpush1.msra.mxu0 0.0
        %2374 = vmatprep.subr.mxu0 0.0
        %2375 = vmatpush1.msra.mxu0 0.0
        %2376 = vmatprep.subr.mxu0 0.0
        %2377 = vmatpush1.msra.mxu0 0.0
        %2378 = vmatprep.subr.mxu0 0.0
        %2379 = vmatpush1.msra.mxu0 0.0
        %2380 = vmatprep.subr.mxu0 0.0
        %2381 = vmatpush1.msra.mxu0 0.0
        %2382 = vmatprep.subr.mxu0 0.0
        %2383 = vmatpush1.msra.mxu0 0.0
        %2384 = vmatprep.subr.mxu0 0.0
        %2385 = vmatpush1.msra.mxu0 0.0
        %2386 = vmatprep.subr.mxu0 0.0
        %2387 = vmatpush1.msra.mxu0 0.0
        %2388 = vmatprep.subr.mxu0 0.0
        %2389 = vmatpush1.msra.mxu0 0.0
        %2390 = vmatprep.subr.mxu0 0.0
        %2391 = vmatpush1.msra.mxu0 0.0
        %2392 = vmatprep.subr.mxu0 0.0
        %2393 = vmatpush1.msra.mxu0 0.0
        %2394 = vmatprep.subr.mxu0 0.0
        %2395 = vmatpush1.msra.mxu0 0.0
        %2396 = vmatprep.subr.mxu0 0.0
        %2397 = vmatpush1.msra.mxu0 0.0
        %2398 = vmatprep.mubr.f32.mxu0 0.0
        %2399 = vmatmul.mubr.f32.gmra.mrb[0].mxu0 %v1911
        %v2400 = vpop.f32.mrb[0].mxu0
        %v2401 = vadd.f32 %v2050, %v2400
        %v2402 = vpop.f32.mrb[0].mxu0
        %v2403 = vadd.f32 %v2050, %v2402
        %2404 = vmatprep.mubr.f32.mxu0 0.0
        %2405 = vmatmul.mubr.f32.gmra.mrb[0].mxu0 %v1912
        %v2406 = vpop.f32.mrb[0].mxu0
        %v2407 = vadd.f32 %v2055, %v2406
        %v2408 = vpop.f32.mrb[0].mxu0
        %v2409 = vadd.f32 %v2055, %v2408
        %2410 = vmatprep.mubr.f32.mxu0 0.0
        %2411 = vmatmul.mubr.f32.gmra.mrb[0].mxu0 %v1913
        %v2412 = vpop.f32.mrb[0].mxu0
        %v2413 = vadd.f32 %v2060, %v2412
        %v2414 = vpop.f32.mrb[0].mxu0
        %v2415 = vadd.f32 %v2060, %v2414
        %2416 = vmatprep.mubr.f32.mxu0 0.0
        %2417 = vmatmul.mubr.f32.gmra.mrb[0].mxu0 %v1914
        %v2418 = vpop.f32.mrb[0].mxu0
        %v2419 = vadd.f32 %v2065, %v2418
        %v2420 = vpop.f32.mrb[0].mxu0
        %v2421 = vadd.f32 %v2065, %v2420
        %2422 = vdwg.mxu0
        %v2423 = vmax.f32 %v265, 0.0
        %v2424 = vmax.f32 %v266, 0.0
        %v2425 = vmax.f32 %v267, 0.0
        %v2426 = vmax.f32 %v268, 0.0
        %v2427 = vmax.f32 %v269, 0.0
        %v2428 = vmax.f32 %v270, 0.0
        %v2429 = vmax.f32 %v271, 0.0
        %v2430 = vmax.f32 %v272, 0.0
        %v2431 = vld [vmem:[%s243 + $0x40] sm:$0xff]
        %v2432 = vld [vmem:[%s243 + $0x48] sm:$0xff]
        %v2433 = vld [vmem:[%s243 + $0x50] sm:$0xff]
        %v2434 = vld [vmem:[%s243 + $0x58] sm:$0xff]
        %v2435 = vld [vmem:[%s243 + $0x60] sm:$0xff]
        %v2436 = vld [vmem:[%s243 + $0x68] sm:$0xff]
        %v2437 = vld [vmem:[%s243 + $0x70] sm:$0xff]
        %v2438 = vld [vmem:[%s243 + $0x78] sm:$0xff]
        %v2439 = vld [vmem:[%s243 + $0x80] sm:$0xff]
        %v2440 = vld [vmem:[%s243 + $0x88] sm:$0xff]
        %v2441 = vld [vmem:[%s243 + $0x90] sm:$0xff]
        %v2442 = vld [vmem:[%s243 + $0x98] sm:$0xff]
        %v2443 = vld [vmem:[%s243 + $0xa0] sm:$0xff]
        %v2444 = vld [vmem:[%s243 + $0xa8] sm:$0xff]
        %v2445 = vld [vmem:[%s243 + $0xb0] sm:$0xff]
        %v2446 = vld [vmem:[%s243 + $0xb8] sm:$0xff]
        %v2447 = vld [vmem:[%s243 + $0xc0] sm:$0xff]
        %v2448 = vld [vmem:[%s243 + $0xc8] sm:$0xff]
        %v2449 = vld [vmem:[%s243 + $0xd0] sm:$0xff]
        %v2450 = vld [vmem:[%s243 + $0xd8] sm:$0xff]
        %v2451 = vld [vmem:[%s243 + $0xe0] sm:$0xff]
        %v2452 = vld [vmem:[%s243 + $0xe8] sm:$0xff]
        %v2453 = vld [vmem:[%s243 + $0xf0] sm:$0xff]
        %v2454 = vld [vmem:[%s243 + $0xf8] sm:$0xff]
        %v2455 = vld [vmem:[%s243 + $0x100] sm:$0xff]
        %v2456 = vld [vmem:[%s243 + $0x108] sm:$0xff]
        %v2457 = vld [vmem:[%s243 + $0x110] sm:$0xff]
        %v2458 = vld [vmem:[%s243 + $0x118] sm:$0xff]
        %v2459 = vld [vmem:[%s243 + $0x120] sm:$0xff]
        %v2460 = vld [vmem:[%s243 + $0x128] sm:$0xff]
        %v2461 = vld [vmem:[%s243 + $0x130] sm:$0xff]
        %v2462 = vld [vmem:[%s243 + $0x138] sm:$0xff]
        %v2463 = vlaneseq
        %v2464 = vshrl.u32 %v2463, 7
        %v2465 = vsub.s32 5, %v2464
        %v2466 = vrot.slane %v2423, %v2465
        %v2467 = vlaneseq
        %v2468 = vshrl.u32 %v2467, 7
        %v2469 = vsub.s32 5, %v2468
        %v2470 = vrot.slane %v2424, %v2469
        %v2471 = vlaneseq
        %v2472 = vshrl.u32 %v2471, 7
        %v2473 = vsub.s32 5, %v2472
        %v2474 = vrot.slane %v2425, %v2473
        %v2475 = vlaneseq
        %v2476 = vshrl.u32 %v2475, 7
        %v2477 = vsub.s32 5, %v2476
        %v2478 = vrot.slane %v2426, %v2477
        %v2479 = vlaneseq
        %v2480 = vshrl.u32 %v2479, 7
        %v2481 = vsub.s32 5, %v2480
        %v2482 = vrot.slane %v2427, %v2481
        %v2483 = vlaneseq
        %v2484 = vshrl.u32 %v2483, 7
        %v2485 = vsub.s32 5, %v2484
        %v2486 = vrot.slane %v2428, %v2485
        %v2487 = vlaneseq
        %v2488 = vshrl.u32 %v2487, 7
        %v2489 = vsub.s32 5, %v2488
        %v2490 = vrot.slane %v2429, %v2489
        %v2491 = vlaneseq
        %v2492 = vshrl.u32 %v2491, 7
        %v2493 = vsub.s32 5, %v2492
        %v2494 = vrot.slane %v2430, %v2493
        %v2495 = vmul.f32 %v2134, %v2466
        %v2496 = vmul.f32 %v2136, %v2470
        %v2497 = vmul.f32 %v2223, %v2474
        %v2498 = vmul.f32 %v2225, %v2478
        %v2499 = vmul.f32 %v2312, %v2482
        %v2500 = vmul.f32 %v2314, %v2486
        %v2501 = vmul.f32 %v2401, %v2490
        %v2502 = vmul.f32 %v2403, %v2494
        %v2503 = vmul.f32 %v2140, %v2466
        %v2504 = vmul.f32 %v2142, %v2470
        %v2505 = vmul.f32 %v2229, %v2474
        %v2506 = vmul.f32 %v2231, %v2478
        %v2507 = vmul.f32 %v2318, %v2482
        %v2508 = vmul.f32 %v2320, %v2486
        %v2509 = vmul.f32 %v2407, %v2490
        %v2510 = vmul.f32 %v2409, %v2494
        %v2511 = vmul.f32 %v2146, %v2466
        %v2512 = vmul.f32 %v2148, %v2470
        %v2513 = vmul.f32 %v2235, %v2474
        %v2514 = vmul.f32 %v2237, %v2478
        %v2515 = vmul.f32 %v2324, %v2482
        %v2516 = vmul.f32 %v2326, %v2486
        %v2517 = vmul.f32 %v2413, %v2490
        %v2518 = vmul.f32 %v2415, %v2494
        %v2519 = vmul.f32 %v2152, %v2466
        %v2520 = vmul.f32 %v2154, %v2470
        %v2521 = vmul.f32 %v2241, %v2474
        %v2522 = vmul.f32 %v2243, %v2478
        %v2523 = vmul.f32 %v2330, %v2482
        %v2524 = vmul.f32 %v2332, %v2486
        %v2525 = vmul.f32 %v2419, %v2490
        %v2526 = vmul.f32 %v2421, %v2494
        %v2527 = vadd.f32 %v2431, %v2495
        %v2528 = vadd.f32 %v2432, %v2496
        %v2529 = vadd.f32 %v2433, %v2497
        %v2530 = vadd.f32 %v2434, %v2498
        %v2531 = vadd.f32 %v2435, %v2499
        %v2532 = vadd.f32 %v2436, %v2500
        %v2533 = vadd.f32 %v2437, %v2501
        %v2534 = vadd.f32 %v2438, %v2502
        %v2535 = vadd.f32 %v2439, %v2503
        %v2536 = vadd.f32 %v2440, %v2504
        %v2537 = vadd.f32 %v2441, %v2505
        %v2538 = vadd.f32 %v2442, %v2506
        %v2539 = vadd.f32 %v2443, %v2507
        %v2540 = vadd.f32 %v2444, %v2508
        %v2541 = vadd.f32 %v2445, %v2509
        %v2542 = vadd.f32 %v2446, %v2510
        %v2543 = vadd.f32 %v2447, %v2511
        %v2544 = vadd.f32 %v2448, %v2512
        %v2545 = vadd.f32 %v2449, %v2513
        %v2546 = vadd.f32 %v2450, %v2514
        %v2547 = vadd.f32 %v2451, %v2515
        %v2548 = vadd.f32 %v2452, %v2516
        %v2549 = vadd.f32 %v2453, %v2517
        %v2550 = vadd.f32 %v2454, %v2518
        %v2551 = vadd.f32 %v2455, %v2519
        %v2552 = vadd.f32 %v2456, %v2520
        %v2553 = vadd.f32 %v2457, %v2521
        %v2554 = vadd.f32 %v2458, %v2522
        %v2555 = vadd.f32 %v2459, %v2523
        %v2556 = vadd.f32 %v2460, %v2524
        %v2557 = vadd.f32 %v2461, %v2525
        %v2558 = vadd.f32 %v2462, %v2526
        %2559 = vst [vmem:[%s262] sm:$0xff] %v2527
        %2560 = vst [vmem:[%s262 + $0x8] sm:$0xff] %v2528
        %2561 = vst [vmem:[%s262 + $0x10] sm:$0xff] %v2529
        %2562 = vst [vmem:[%s262 + $0x18] sm:$0xff] %v2530
        %2563 = vst [vmem:[%s262 + $0x20] sm:$0xff] %v2531
        %2564 = vst [vmem:[%s262 + $0x28] sm:$0xff] %v2532
        %2565 = vst [vmem:[%s262 + $0x30] sm:$0xff] %v2533
        %2566 = vst [vmem:[%s262 + $0x38] sm:$0xff] %v2534
        %2567 = vst [vmem:[%s262 + $0x40] sm:$0xff] %v2535
        %2568 = vst [vmem:[%s262 + $0x48] sm:$0xff] %v2536
        %2569 = vst [vmem:[%s262 + $0x50] sm:$0xff] %v2537
        %2570 = vst [vmem:[%s262 + $0x58] sm:$0xff] %v2538
        %2571 = vst [vmem:[%s262 + $0x60] sm:$0xff] %v2539
        %2572 = vst [vmem:[%s262 + $0x68] sm:$0xff] %v2540
        %2573 = vst [vmem:[%s262 + $0x70] sm:$0xff] %v2541
        %2574 = vst [vmem:[%s262 + $0x78] sm:$0xff] %v2542
        %2575 = vst [vmem:[%s262 + $0x80] sm:$0xff] %v2543
        %2576 = vst [vmem:[%s262 + $0x88] sm:$0xff] %v2544
        %2577 = vst [vmem:[%s262 + $0x90] sm:$0xff] %v2545
        %2578 = vst [vmem:[%s262 + $0x98] sm:$0xff] %v2546
        %2579 = vst [vmem:[%s262 + $0xa0] sm:$0xff] %v2547
        %2580 = vst [vmem:[%s262 + $0xa8] sm:$0xff] %v2548
        %2581 = vst [vmem:[%s262 + $0xb0] sm:$0xff] %v2549
        %2582 = vst [vmem:[%s262 + $0xb8] sm:$0xff] %v2550
        %2583 = vst [vmem:[%s262 + $0xc0] sm:$0xff] %v2551
        %2584 = vst [vmem:[%s262 + $0xc8] sm:$0xff] %v2552
        %2585 = vst [vmem:[%s262 + $0xd0] sm:$0xff] %v2553
        %2586 = vst [vmem:[%s262 + $0xd8] sm:$0xff] %v2554
        %2587 = vst [vmem:[%s262 + $0xe0] sm:$0xff] %v2555
        %2588 = vst [vmem:[%s262 + $0xe8] sm:$0xff] %v2556
        %2589 = vst [vmem:[%s262 + $0xf0] sm:$0xff] %v2557
        %2590 = vst [vmem:[%s262 + $0xf8] sm:$0xff] %v2558
        %v2591 = vld [vmem:[%s243 + $0x40] sm:$0x7]
        %v2592 = vld [vmem:[%s243 + $0x48] sm:$0x7]
        %v2593 = vld [vmem:[%s243 + $0x50] sm:$0x7]
        %v2594 = vld [vmem:[%s243 + $0x58] sm:$0x7]
        %v2595 = vld [vmem:[%s243 + $0x60] sm:$0x7]
        %v2596 = vld [vmem:[%s243 + $0x68] sm:$0x7]
        %v2597 = vld [vmem:[%s243 + $0x70] sm:$0x7]
        %v2598 = vld [vmem:[%s243 + $0x78] sm:$0x7]
        %v2599 = vlaneseq
        %v2600 = vshrl.u32 %v2599, 7
        %v2601 = vsub.s32 4, %v2600
        %v2602 = vrot.slane %v2423, %v2601
        %v2603 = vlaneseq
        %v2604 = vshrl.u32 %v2603, 7
        %v2605 = vsub.s32 4, %v2604
        %v2606 = vrot.slane %v2424, %v2605
        %v2607 = vlaneseq
        %v2608 = vshrl.u32 %v2607, 7
        %v2609 = vsub.s32 4, %v2608
        %v2610 = vrot.slane %v2425, %v2609
        %v2611 = vlaneseq
        %v2612 = vshrl.u32 %v2611, 7
        %v2613 = vsub.s32 4, %v2612
        %v2614 = vrot.slane %v2426, %v2613
        %v2615 = vlaneseq
        %v2616 = vshrl.u32 %v2615, 7
        %v2617 = vsub.s32 4, %v2616
        %v2618 = vrot.slane %v2427, %v2617
        %v2619 = vlaneseq
        %v2620 = vshrl.u32 %v2619, 7
        %v2621 = vsub.s32 4, %v2620
        %v2622 = vrot.slane %v2428, %v2621
        %v2623 = vlaneseq
        %v2624 = vshrl.u32 %v2623, 7
        %v2625 = vsub.s32 4, %v2624
        %v2626 = vrot.slane %v2429, %v2625
        %v2627 = vlaneseq
        %v2628 = vshrl.u32 %v2627, 7
        %v2629 = vsub.s32 4, %v2628
        %v2630 = vrot.slane %v2430, %v2629
        %v2631 = vmul.f32 %v2134, %v2602
        %v2632 = vmul.f32 %v2136, %v2606
        %v2633 = vmul.f32 %v2223, %v2610
        %v2634 = vmul.f32 %v2225, %v2614
        %v2635 = vmul.f32 %v2312, %v2618
        %v2636 = vmul.f32 %v2314, %v2622
        %v2637 = vmul.f32 %v2401, %v2626
        %v2638 = vmul.f32 %v2403, %v2630
        %v2639 = vadd.f32 %v2591, %v2631
        %v2640 = vadd.f32 %v2592, %v2632
        %v2641 = vadd.f32 %v2593, %v2633
        %v2642 = vadd.f32 %v2594, %v2634
        %v2643 = vadd.f32 %v2595, %v2635
        %v2644 = vadd.f32 %v2596, %v2636
        %v2645 = vadd.f32 %v2597, %v2637
        %v2646 = vadd.f32 %v2598, %v2638
        %2647 = vst [vmem:[%s262] sm:$0x7] %v2639
        %2648 = vst [vmem:[%s262 + $0x8] sm:$0x7] %v2640
        %2649 = vst [vmem:[%s262 + $0x10] sm:$0x7] %v2641
        %2650 = vst [vmem:[%s262 + $0x18] sm:$0x7] %v2642
        %2651 = vst [vmem:[%s262 + $0x20] sm:$0x7] %v2643
        %2652 = vst [vmem:[%s262 + $0x28] sm:$0x7] %v2644
        %2653 = vst [vmem:[%s262 + $0x30] sm:$0x7] %v2645
        %2654 = vst [vmem:[%s262 + $0x38] sm:$0x7] %v2646
        %s2655 = sand.u32 %s90, 1
        %s2656 = sand.u32 %s90, 1
        %s2657 = smul.addr %s2656, 256
        %s2658 = scalar_lea.vmem [#allocation3], %s2657
        // Predicated region
        $region56: #{deform_forward.1} parent=50 // pred_check
          %p2659 = pneg %p100
        $region57: #{deform_forward.1} parent=50 // pred_check_branch
          %2661 = sbr.rel (%p2659) target = $region59
        $region58: #{deform_forward.1} parent=50 // pred_region
          %s2662 = smul.u32 8, %s14
          %s2663 = smul.addr %s2662, 8
          %s2664 = scalar_lea.vmem %s3, %s2663
          // Predicated region
          $region60: #{deform_forward.1} parent=58 // pred_check
            _
          $region61: #{deform_forward.1} parent=58 // pred_check_branch
            %2666 = sbr.rel (0) target = $region63
          $region62: #{deform_forward.1} parent=58 // pred_region
            // Predicated region
            $region64: #{deform_forward.1} parent=62 // pred_check
              _
            $region65: #{deform_forward.1} parent=62 // pred_check_branch
              %2668 = sbr.rel (0) target = $region67
            $region66: #{deform_forward.1} parent=62 // pred_region
              loop: start=0, step=1, limit=1
              $region68: #{deform_forward.1} parent=66 // loop_pre_header
                _
              $region69: #{deform_forward.1} parent=66 // loop_header
                %s2670 = sphi 0, %s2674
                %p2671 = scmp.ge.s32.totalorder %s2670, 1
                %s2675 = sphi %s2658, %s2658
                %s2676 = sphi %s2664, %s2664
              $region70: #{deform_forward.1} parent=66 // loop_header_branch
                %2673 = sbr.rel (%p2671) target = $region74
              $region71: #{deform_forward.1} parent=66 // loop_body
                %v2677 = vld [vmem:[%s2675] sm:$0xff]
                %2678 = vst [vmem:[%s2676] sm:$0xff] %v2677
                %v2679 = vld [vmem:[%s2675 + $0x8] sm:$0xff]
                %2680 = vst [vmem:[%s2676 + $0x8] sm:$0xff] %v2679
                %v2681 = vld [vmem:[%s2675 + $0x10] sm:$0xff]
                %2682 = vst [vmem:[%s2676 + $0x10] sm:$0xff] %v2681
                %v2683 = vld [vmem:[%s2675 + $0x18] sm:$0xff]
                %2684 = vst [vmem:[%s2676 + $0x18] sm:$0xff] %v2683
                %v2685 = vld [vmem:[%s2675 + $0x20] sm:$0xff]
                %2686 = vst [vmem:[%s2676 + $0x20] sm:$0xff] %v2685
                %v2687 = vld [vmem:[%s2675 + $0x28] sm:$0xff]
                %2688 = vst [vmem:[%s2676 + $0x28] sm:$0xff] %v2687
                %v2689 = vld [vmem:[%s2675 + $0x30] sm:$0xff]
                %2690 = vst [vmem:[%s2676 + $0x30] sm:$0xff] %v2689
                %v2691 = vld [vmem:[%s2675 + $0x38] sm:$0xff]
                %2692 = vst [vmem:[%s2676 + $0x38] sm:$0xff] %v2691
                %v2693 = vld [vmem:[%s2675 + $0x40] sm:$0xff]
                %2694 = vst [vmem:[%s2676 + $0x80] sm:$0xff] %v2693
                %v2695 = vld [vmem:[%s2675 + $0x48] sm:$0xff]
                %2696 = vst [vmem:[%s2676 + $0x88] sm:$0xff] %v2695
                %v2697 = vld [vmem:[%s2675 + $0x50] sm:$0xff]
                %2698 = vst [vmem:[%s2676 + $0x90] sm:$0xff] %v2697
                %v2699 = vld [vmem:[%s2675 + $0x58] sm:$0xff]
                %2700 = vst [vmem:[%s2676 + $0x98] sm:$0xff] %v2699
                %v2701 = vld [vmem:[%s2675 + $0x60] sm:$0xff]
                %2702 = vst [vmem:[%s2676 + $0xa0] sm:$0xff] %v2701
                %v2703 = vld [vmem:[%s2675 + $0x68] sm:$0xff]
                %2704 = vst [vmem:[%s2676 + $0xa8] sm:$0xff] %v2703
                %v2705 = vld [vmem:[%s2675 + $0x70] sm:$0xff]
                %2706 = vst [vmem:[%s2676 + $0xb0] sm:$0xff] %v2705
                %v2707 = vld [vmem:[%s2675 + $0x78] sm:$0xff]
                %2708 = vst [vmem:[%s2676 + $0xb8] sm:$0xff] %v2707
                %v2709 = vld [vmem:[%s2675 + $0x80] sm:$0xff]
                %2710 = vst [vmem:[%s2676 + $0x100] sm:$0xff] %v2709
                %v2711 = vld [vmem:[%s2675 + $0x88] sm:$0xff]
                %2712 = vst [vmem:[%s2676 + $0x108] sm:$0xff] %v2711
                %v2713 = vld [vmem:[%s2675 + $0x90] sm:$0xff]
                %2714 = vst [vmem:[%s2676 + $0x110] sm:$0xff] %v2713
                %v2715 = vld [vmem:[%s2675 + $0x98] sm:$0xff]
                %2716 = vst [vmem:[%s2676 + $0x118] sm:$0xff] %v2715
                %v2717 = vld [vmem:[%s2675 + $0xa0] sm:$0xff]
                %2718 = vst [vmem:[%s2676 + $0x120] sm:$0xff] %v2717
                %v2719 = vld [vmem:[%s2675 + $0xa8] sm:$0xff]
                %2720 = vst [vmem:[%s2676 + $0x128] sm:$0xff] %v2719
                %v2721 = vld [vmem:[%s2675 + $0xb0] sm:$0xff]
                %2722 = vst [vmem:[%s2676 + $0x130] sm:$0xff] %v2721
                %v2723 = vld [vmem:[%s2675 + $0xb8] sm:$0xff]
                %2724 = vst [vmem:[%s2676 + $0x138] sm:$0xff] %v2723
                %v2725 = vld [vmem:[%s2675 + $0xc0] sm:$0xff]
                %2726 = vst [vmem:[%s2676 + $0x180] sm:$0xff] %v2725
                %v2727 = vld [vmem:[%s2675 + $0xc8] sm:$0xff]
                %2728 = vst [vmem:[%s2676 + $0x188] sm:$0xff] %v2727
                %v2729 = vld [vmem:[%s2675 + $0xd0] sm:$0xff]
                %2730 = vst [vmem:[%s2676 + $0x190] sm:$0xff] %v2729
                %v2731 = vld [vmem:[%s2675 + $0xd8] sm:$0xff]
                %2732 = vst [vmem:[%s2676 + $0x198] sm:$0xff] %v2731
                %v2733 = vld [vmem:[%s2675 + $0xe0] sm:$0xff]
                %2734 = vst [vmem:[%s2676 + $0x1a0] sm:$0xff] %v2733
                %v2735 = vld [vmem:[%s2675 + $0xe8] sm:$0xff]
                %2736 = vst [vmem:[%s2676 + $0x1a8] sm:$0xff] %v2735
                %v2737 = vld [vmem:[%s2675 + $0xf0] sm:$0xff]
                %2738 = vst [vmem:[%s2676 + $0x1b0] sm:$0xff] %v2737
                %v2739 = vld [vmem:[%s2675 + $0xf8] sm:$0xff]
                %2740 = vst [vmem:[%s2676 + $0x1b8] sm:$0xff] %v2739
              $region72: #{deform_forward.1} parent=66 // loop_footer
                %s2674 = sadd.s32 1, %s2670
              $region73: #{deform_forward.1} parent=66 // loop_footer_branch
                %2669 = sbr.rel target = $region69
              $region74: #{deform_forward.1} parent=66 // loop_exit
                _
            $region67: #{deform_forward.1} parent=62 // pred_fallthru
              _
            // Predicated region
            $region75: #{deform_forward.1} parent=62 // pred_check
              _
            $region76: #{deform_forward.1} parent=62 // pred_check_branch
              %2742 = sbr.rel target = $region78
            $region77: #{deform_forward.1} parent=62 // pred_region
              _
            $region78: #{deform_forward.1} parent=62 // pred_fallthru
              _
          $region63: #{deform_forward.1} parent=58 // pred_fallthru
            _
          %2743 = vnop
        $region59: #{deform_forward.1} parent=50 // pred_fallthru
          _
      $region51: #{deform_forward.1} parent=5 // pred_fallthru
        _
      %p2744 = scmp.le.s32.totalorder 2, %s9
      // Predicated region
      $region79: #{deform_forward.1} parent=5 // pred_check
        %p2745 = pneg %p2744
      $region80: #{deform_forward.1} parent=5 // pred_check_branch
        %2747 = sbr.rel (%p2745) target = $region82
      $region81: #{deform_forward.1} parent=5 // pred_region
        %s2748 = ssub.s32 %s9, 2
        // Predicated region
        $region83: #{deform_forward.1} parent=81 // pred_check
          %p2749 = pneg %p106
        $region84: #{deform_forward.1} parent=81 // pred_check_branch
          %2751 = sbr.rel (%p2749) target = $region86
        $region85: #{deform_forward.1} parent=81 // pred_region
          %s2752 = sand.u32 %s91, 1
          %s2753 = sand.u32 %s91, 1
          %s2754 = smul.addr %s2753, 256
          %s2755 = scalar_lea.vmem [#allocation3], %s2754
        $region86: #{deform_forward.1} parent=81 // pred_fallthru
          _
      $region82: #{deform_forward.1} parent=5 // pred_fallthru
        _
    $region6: #{deform_forward.1} parent=1 // loop_footer
      %s13 = sadd.s32 1, %s9
    $region7: #{deform_forward.1} parent=1 // loop_footer_branch
      %8 = sbr.rel target = $region3
    $region8: #{deform_forward.1} parent=1 // loop_exit
      _

</llo_original>
